<compile_context>
chip_gen: v6e
topology: v6e:2x2x1
jax: 0.10.0
libtpu: 0.0.40
codegen_flags: <defaults>
</compile_context>

<pallas_src>
import jax
import jax.numpy as jnp
from jax.experimental import pallas as pl
from jax.experimental.pallas import tpu as pltpu

SDF_SIZE = 8
LATENT_SIZE = 8
ENC_CONV_OUT_CH = 4
ENC_FC_HIDDEN = 64
DEC_FC_LAYERS = [dict(out=32), dict(out=128)]
DEC_CONV_LAYERS = [
    dict(in_channels=2, out_channels=4, kernel_size=3, in_size=4, relu=True),
    dict(in_channels=4, out_channels=1, kernel_size=3, in_size=6, relu=False),
]
# sanity check (mirrors SDFDecoder.sanity_check)
assert DEC_FC_LAYERS[-1]["out"] == DEC_CONV_LAYERS[0]["in_channels"] * DEC_CONV_LAYERS[0]["in_size"] ** 3
assert DEC_CONV_LAYERS[0]["out_channels"] == DEC_CONV_LAYERS[1]["in_channels"]
assert DEC_CONV_LAYERS[-1]["out_channels"] == 1

LANE = 128
SUBLANE = 8


def _rup(x, m):
    return ((int(x) + m - 1) // m) * m


# ----------------------------- fused Pallas kernel ----------------------------- #
def _fused_vae_kernel(
    x_ref, eps_ref,
    w_ec_ref, b_ec_ref,          # encoder Conv3d (dense matmul form, lane-padded)
    w_fc_ref, b_fc_ref,          # encoder Linear(864,64) (lane-padded)
    w_hd_ref, b_hd_ref,          # fused [means | log_var] heads (padded rows)
    w_d1_ref, b_d1_ref,          # decoder Linear(8,32) (lane-padded)
    w_d2_ref, b_d2_ref,          # decoder Linear(32,128) (padded rows)
    w_c1_ref, b_c1_ref,          # decoder Conv3d(2,4) (dense, lane-padded)
    w_ch_ref, b_ch_ref,          # interp->Conv3d(4,1)->interp chain (dense, padded rows)
    recon_ref, means_ref, logvar_ref, z_ref,
):
    def affine(a, w_ref, b_ref, relu):
        y = jnp.dot(a, w_ref[...], preferred_element_type=jnp.float32) + b_ref[...]
        return jnp.maximum(y, 0.0) if relu else y

    # ---- encoder ----
    h = affine(x_ref[...], w_ec_ref, b_ec_ref, relu=True)       # Conv3d(1->4) as matmul
    h = affine(h, w_fc_ref, b_fc_ref, relu=True)                 # Linear(864,64) + ReLU
    ml = affine(h, w_hd_ref, b_hd_ref, relu=False)               # (N, 2*latent)
    means = ml[:, :LATENT_SIZE]
    log_var = ml[:, LATENT_SIZE:2 * LATENT_SIZE]

    # ---- reparameterize: z = eps * exp(0.5 * log_var) + means (exp -> EUP slot) ----
    z = eps_ref[...] * jnp.exp(0.5 * log_var) + means

    # ---- decoder ----
    d = affine(z, w_d1_ref, b_d1_ref, relu=True)                 # Linear(8,32) + ReLU
    d = affine(d, w_d2_ref, b_d2_ref, relu=True)                 # Linear(32,128) + ReLU
    c = affine(d, w_c1_ref, b_c1_ref, relu=True)                 # Conv3d(2->4) as matmul + ReLU
    recon = affine(c, w_ch_ref, b_ch_ref, relu=False)            # interp->Conv3d(4->1)->interp

    recon_ref[...] = recon
    means_ref[...] = means
    logvar_ref[...] = log_var
    z_ref[...] = z


def _full_spec(shape):
    nd = len(shape)
    return pl.BlockSpec(tuple(int(s) for s in shape), lambda i, _n=nd: (0,) * _n)


def sdf_vae_forward(dense_params, x, eps):
    """SDFVAE.forward: returns (recon_x, means, log_var, z). One fused pallas_call."""
    n = x.shape[0]
    n_pad = _rup(max(n, 1), SUBLANE)                 # sublane-aligned batch
    x_flat = x.reshape(n, -1)                        # NCDHW flatten (c-major), free bitcast
    x_flat = jnp.pad(x_flat, ((0, n_pad - n), (0, 0)))
    eps_p = jnp.pad(eps, ((0, n_pad - n), (0, 0)))

    order = [
        "w_enc_conv", "b_enc_conv", "w_enc_fc", "b_enc_fc", "w_heads", "b_heads",
        "w_dec_fc1", "b_dec_fc1", "w_dec_fc2", "b_dec_fc2",
        "w_dec_conv1", "b_dec_conv1", "w_dec_chain", "b_dec_chain",
    ]
    operands = [x_flat, eps_p] + [dense_params[k] for k in order]
    out_shapes = (
        jax.ShapeDtypeStruct((n_pad, SDF_SIZE ** 3), jnp.float32),   # lane-dense (512 = 4*128)
        jax.ShapeDtypeStruct((n_pad, LATENT_SIZE), jnp.float32),
        jax.ShapeDtypeStruct((n_pad, LATENT_SIZE), jnp.float32),
        jax.ShapeDtypeStruct((n_pad, LATENT_SIZE), jnp.float32),
    )
    recon_flat, means, log_var, z = pl.pallas_call(
        _fused_vae_kernel,
        out_shape=out_shapes,
        grid=(1,),
        in_specs=[_full_spec(op.shape) for op in operands],
        out_specs=tuple(_full_spec(s.shape) for s in out_shapes),
        compiler_params=pltpu.CompilerParams(dimension_semantics=("arbitrary",)),
    )(*operands)
    recon_x = recon_flat[:n].reshape(n, 1, SDF_SIZE, SDF_SIZE, SDF_SIZE)
    return recon_x, means[:n], log_var[:n], z[:n]


# ------------- host-side (setup-time) folding of conv/interp into matmuls ------------- #
def _conv3d_ref(x, w, b):
    """PyTorch nn.Conv3d (stride 1, pad 0) reference. x:(B,C,D,D,D) w:(O,C,k,k,k)."""
    o_ch, c_ch, k, _, _ = w.shape
    d = x.shape[2]
    o = d - k + 1
    patches = []
    for dz in range(k):
        for dy in range(k):
            for dx in range(k):
                patches.append(x[:, :, dz:dz + o, dy:dy + o, dx:dx + o])
    p = jnp.stack(patches, axis=2)                   # (B, C, k^3, o, o, o), (kz,ky,kx) order
    wf = w.reshape(o_ch, c_ch, k * k * k)
    y = jnp.einsum("bcpzyx,ocp->bozyx", p, wf)
    return y + b.reshape(1, o_ch, 1, 1, 1)


def _interp_axis(x, axis, out_size):
    in_size = x.shape[axis]
    src = (jnp.arange(out_size, dtype=jnp.float32) + 0.5) * (in_size / out_size) - 0.5
    src = jnp.clip(src, 0.0, in_size - 1)
    lo = jnp.floor(src).astype(jnp.int32)
    hi = jnp.minimum(lo + 1, in_size - 1)
    wgt = (src - lo.astype(jnp.float32)).astype(x.dtype)
    xlo = jnp.take(x, lo, axis=axis)
    xhi = jnp.take(x, hi, axis=axis)
    shape = [1] * x.ndim
    shape[axis] = out_size
    wgt = wgt.reshape(shape)
    return xlo * (1.0 - wgt) + xhi * wgt


def _trilinear_ref(x, out_size):
    """Matches torch.nn.functional.interpolate(mode='trilinear', align_corners=False)."""
    for axis in (2, 3, 4):
        x = _interp_axis(x, axis, out_size)
    return x


def _linearize(fn, in_shape):
    """Express an affine map fn on (B,)+in_shape as (W, b): fn(x).flat == x.flat @ W + b."""
    n_in = 1
    for s in in_shape:
        n_in *= int(s)
    bias = fn(jnp.zeros((1,) + tuple(in_shape), jnp.float32)).reshape(1, -1)
    basis = jnp.eye(n_in, dtype=jnp.float32).reshape((n_in,) + tuple(in_shape))
    w = fn(basis).reshape(n_in, -1) - bias
    return w, bias


def _pad2(m, rows, cols):
    """Zero-pad a 2D matrix up to (rows, cols). Exact for the affine+ReLU chain."""
    return jnp.pad(m, ((0, rows - m.shape[0]), (0, cols - m.shape[1])))


def make_dense_params(params):
    """Fold Conv3d layers / trilinear resamplings into dense matrices & lane-pad them.

    Runs once at setup time (host/XLA), so the fused Pallas kernel is pure matmul+bias+ReLU
    on lane-aligned operands.
    """
    c0, c1 = DEC_CONV_LAYERS
    enc_conv_out = SDF_SIZE - 3 + 1                                 # 6
    enc_flat = ENC_CONV_OUT_CH * enc_conv_out ** 3                  # 864
    enc_flat_p = _rup(enc_flat, LANE)                               # 896
    hid_p = _rup(ENC_FC_HIDDEN, LANE)                               # 128
    fc1_p = _rup(DEC_FC_LAYERS[0]["out"], LANE)                     # 128
    fc2 = DEC_FC_LAYERS[1]["out"]                                   # 128
    conv1_out_size = c0["in_size"] - c0["kernel_size"] + 1          # 2
    conv1_flat = c0["out_channels"] * conv1_out_size ** 3           # 32
    conv1_flat_p = _rup(conv1_flat, LANE)                           # 128

    # encoder Conv3d(1,4,k=3) on SDF_SIZE^3 input -> flattened (864,) output
    w_ec, b_ec = _linearize(
        lambda v: _conv3d_ref(v, params["enc_conv_w"], params["enc_conv_b"]),
        (1, SDF_SIZE, SDF_SIZE, SDF_SIZE),
    )
    # decoder Conv3d(2,4,k=3) on 4^3 input -> flattened (32,) output
    w_c1, b_c1 = _linearize(
        lambda v: _conv3d_ref(v, params["dec_conv1_w"], params["dec_conv1_b"]),
        (c0["in_channels"], c0["in_size"], c0["in_size"], c0["in_size"]),
    )

    # decoder tail: trilinear(->6) -> Conv3d(4,1,k=3) -> trilinear(->SDF_SIZE)
    def tail(v):
        v = _trilinear_ref(v, c1["in_size"])
        v = _conv3d_ref(v, params["dec_conv2_w"], params["dec_conv2_b"])
        return _trilinear_ref(v, SDF_SIZE)

    w_ch, b_ch = _linearize(
        tail, (c0["out_channels"], conv1_out_size, conv1_out_size, conv1_out_size))

    w_hd = jnp.concatenate([params["means_w"], params["logvar_w"]], axis=1)
    b_hd = jnp.concatenate([params["means_b"], params["logvar_b"]]).reshape(1, -1)

    return dict(
        w_enc_conv=_pad2(w_ec, SDF_SIZE ** 3, enc_flat_p),
        b_enc_conv=_pad2(b_ec, 1, enc_flat_p),
        w_enc_fc=_pad2(params["enc_fc_w"], enc_flat_p, hid_p),
        b_enc_fc=_pad2(params["enc_fc_b"].reshape(1, -1), 1, hid_p),
        w_heads=_pad2(w_hd, hid_p, 2 * LATENT_SIZE),
        b_heads=b_hd,
        w_dec_fc1=_pad2(params["dec_fc1_w"], LATENT_SIZE, fc1_p),
        b_dec_fc1=_pad2(params["dec_fc1_b"].reshape(1, -1), 1, fc1_p),
        w_dec_fc2=_pad2(params["dec_fc2_w"], fc1_p, fc2),
        b_dec_fc2=params["dec_fc2_b"].reshape(1, -1),
        w_dec_conv1=_pad2(w_c1, fc2, conv1_flat_p),
        b_dec_conv1=_pad2(b_c1, 1, conv1_flat_p),
        w_dec_chain=_pad2(w_ch, conv1_flat_p, SDF_SIZE ** 3),
        b_dec_chain=b_ch,
    )


# --------------------------- pure-JAX unfolded reference --------------------------- #
def reference_forward(params, x, eps):
    """Unfused/unfolded reference matching the PyTorch SDFVAE.forward semantics."""
    n = x.shape[0]
    c0, c1 = DEC_CONV_LAYERS
    h = jnp.maximum(_conv3d_ref(x, params["enc_conv_w"], params["enc_conv_b"]), 0.0)
    h = h.reshape(n, -1)
    h = jnp.maximum(h @ params["enc_fc_w"] + params["enc_fc_b"], 0.0)
    means = h @ params["means_w"] + params["means_b"]
    log_var = h @ params["logvar_w"] + params["logvar_b"]
    z = eps * jnp.exp(0.5 * log_var) + means
    d = jnp.maximum(z @ params["dec_fc1_w"] + params["dec_fc1_b"], 0.0)
    d = jnp.maximum(d @ params["dec_fc2_w"] + params["dec_fc2_b"], 0.0)
    v = d.reshape(n, c0["in_channels"], c0["in_size"], c0["in_size"], c0["in_size"])
    v = jnp.maximum(_conv3d_ref(v, params["dec_conv1_w"], params["dec_conv1_b"]), 0.0)
    v = _trilinear_ref(v, c1["in_size"])
    v = _conv3d_ref(v, params["dec_conv2_w"], params["dec_conv2_b"])
    v = _trilinear_ref(v, SDF_SIZE)
    return v, means, log_var, z


# --------------------------------- parameters --------------------------------- #
def init_params(key):
    def nrm(k, shape, scale=0.05):
        return scale * jax.random.normal(k, shape, dtype=jnp.float32)

    ks = jax.random.split(key, 16)
    enc_conv_out = SDF_SIZE - 3 + 1                       # 6
    flat = ENC_CONV_OUT_CH * enc_conv_out ** 3            # 864
    return dict(
        enc_conv_w=nrm(ks[0], (ENC_CONV_OUT_CH, 1, 3, 3, 3)),
        enc_conv_b=nrm(ks[1], (ENC_CONV_OUT_CH,)),
        enc_fc_w=nrm(ks[2], (flat, ENC_FC_HIDDEN)),
        enc_fc_b=nrm(ks[3], (ENC_FC_HIDDEN,)),
        means_w=nrm(ks[4], (ENC_FC_HIDDEN, LATENT_SIZE)),
        means_b=nrm(ks[5], (LATENT_SIZE,)),
        logvar_w=nrm(ks[6], (ENC_FC_HIDDEN, LATENT_SIZE)),
        logvar_b=nrm(ks[7], (LATENT_SIZE,)),
        dec_fc1_w=nrm(ks[8], (LATENT_SIZE, DEC_FC_LAYERS[0]["out"])),
        dec_fc1_b=nrm(ks[9], (DEC_FC_LAYERS[0]["out"],)),
        dec_fc2_w=nrm(ks[10], (DEC_FC_LAYERS[0]["out"], DEC_FC_LAYERS[1]["out"])),
        dec_fc2_b=nrm(ks[11], (DEC_FC_LAYERS[1]["out"],)),
        dec_conv1_w=nrm(ks[12], (4, 2, 3, 3, 3)),
        dec_conv1_b=nrm(ks[13], (4,)),
        dec_conv2_w=nrm(ks[14], (1, 4, 3, 3, 3)),
        dec_conv2_b=nrm(ks[15], (1,)),
    )


if __name__ == "__main__":
    key = jax.random.PRNGKey(0)
    kp, kx, ke = jax.random.split(key, 3)
    params = init_params(kp)

    x = jax.random.normal(kx, (2, 1, SDF_SIZE, SDF_SIZE, SDF_SIZE), dtype=jnp.float32)
    eps = jax.random.normal(ke, (2, LATENT_SIZE), dtype=jnp.float32)

    # TODO(synk): dense folding is an inference-time transform; re-run make_dense_params
    # whenever the underlying conv weights change (e.g. during training).
    with jax.default_matmul_precision("highest"):
        dense_params = make_dense_params(params)   # one-time setup, outside the jitted hot path
        ref = reference_forward(params, x, eps)

    fwd = jax.jit(sdf_vae_forward)
    recon_x, means, log_var, z = fwd(dense_params, x, eps)
    jax.block_until_ready((recon_x, means, log_var, z))

    assert recon_x.shape == (2, 1, SDF_SIZE, SDF_SIZE, SDF_SIZE)
    assert means.shape == (2, LATENT_SIZE)
    assert log_var.shape == (2, LATENT_SIZE)
    assert z.shape == (2, LATENT_SIZE)

    # correctness vs. unfolded reference (loose tol: folded matmuls vs unfolded gather path)
    r_ref, m_ref, lv_ref, z_ref = ref
    assert bool(jnp.allclose(means, m_ref, atol=5e-2))
    assert bool(jnp.allclose(log_var, lv_ref, atol=5e-2))
    assert bool(jnp.allclose(z, z_ref, atol=5e-2))
    assert bool(jnp.allclose(recon_x, r_ref, atol=5e-2))

    print("KERNEL_OK")
</pallas_src>

<mosaic_0001>
module attributes {stable_mosaic.version = 11 : i64} {
  func.func @_fused_vae_kernel(%arg0: i32, %arg1: memref<8x512xf32, #tpu.memory_space<vmem>>, %arg2: memref<8x8xf32, #tpu.memory_space<vmem>>, %arg3: memref<512x896xf32, #tpu.memory_space<vmem>>, %arg4: memref<1x896xf32, #tpu.memory_space<vmem>>, %arg5: memref<896x128xf32, #tpu.memory_space<vmem>>, %arg6: memref<1x128xf32, #tpu.memory_space<vmem>>, %arg7: memref<128x16xf32, #tpu.memory_space<vmem>>, %arg8: memref<1x16xf32, #tpu.memory_space<vmem>>, %arg9: memref<8x128xf32, #tpu.memory_space<vmem>>, %arg10: memref<1x128xf32, #tpu.memory_space<vmem>>, %arg11: memref<128x128xf32, #tpu.memory_space<vmem>>, %arg12: memref<1x128xf32, #tpu.memory_space<vmem>>, %arg13: memref<128x128xf32, #tpu.memory_space<vmem>>, %arg14: memref<1x128xf32, #tpu.memory_space<vmem>>, %arg15: memref<128x512xf32, #tpu.memory_space<vmem>>, %arg16: memref<1x512xf32, #tpu.memory_space<vmem>>, %arg17: memref<8x512xf32, #tpu.memory_space<vmem>>, %arg18: memref<8x8xf32, #tpu.memory_space<vmem>>, %arg19: memref<8x8xf32, #tpu.memory_space<vmem>>, %arg20: memref<8x8xf32, #tpu.memory_space<vmem>>) attributes {dimension_semantics = [#tpu.dimension_semantics<arbitrary>], iteration_bounds = array<i64: 1>, scalar_prefetch = 0 : i64, scratch_operands = 0 : i64, tpu.core_type = #tpu.core_type<tc>, window_params = [{pipeline_mode = #tpu.pipeline_mode<synchronous>, transform_indices = @transform_0, window_bounds = array<i64: 8, 512>}, {pipeline_mode = #tpu.pipeline_mode<synchronous>, transform_indices = @transform_1, window_bounds = array<i64: 8, 8>}, {pipeline_mode = #tpu.pipeline_mode<synchronous>, transform_indices = @transform_2, window_bounds = array<i64: 512, 896>}, {pipeline_mode = #tpu.pipeline_mode<synchronous>, transform_indices = @transform_3, window_bounds = array<i64: 1, 896>}, {pipeline_mode = #tpu.pipeline_mode<synchronous>, transform_indices = @transform_4, window_bounds = array<i64: 896, 128>}, {pipeline_mode = #tpu.pipeline_mode<synchronous>, transform_indices = @transform_5, window_bounds = array<i64: 1, 128>}, {pipeline_mode = #tpu.pipeline_mode<synchronous>, transform_indices = @transform_6, window_bounds = array<i64: 128, 16>}, {pipeline_mode = #tpu.pipeline_mode<synchronous>, transform_indices = @transform_7, window_bounds = array<i64: 1, 16>}, {pipeline_mode = #tpu.pipeline_mode<synchronous>, transform_indices = @transform_8, window_bounds = array<i64: 8, 128>}, {pipeline_mode = #tpu.pipeline_mode<synchronous>, transform_indices = @transform_9, window_bounds = array<i64: 1, 128>}, {pipeline_mode = #tpu.pipeline_mode<synchronous>, transform_indices = @transform_10, window_bounds = array<i64: 128, 128>}, {pipeline_mode = #tpu.pipeline_mode<synchronous>, transform_indices = @transform_11, window_bounds = array<i64: 1, 128>}, {pipeline_mode = #tpu.pipeline_mode<synchronous>, transform_indices = @transform_12, window_bounds = array<i64: 128, 128>}, {pipeline_mode = #tpu.pipeline_mode<synchronous>, transform_indices = @transform_13, window_bounds = array<i64: 1, 128>}, {pipeline_mode = #tpu.pipeline_mode<synchronous>, transform_indices = @transform_14, window_bounds = array<i64: 128, 512>}, {pipeline_mode = #tpu.pipeline_mode<synchronous>, transform_indices = @transform_15, window_bounds = array<i64: 1, 512>}, {pipeline_mode = #tpu.pipeline_mode<synchronous>, transform_indices = @transform_16, window_bounds = array<i64: 8, 512>}, {pipeline_mode = #tpu.pipeline_mode<synchronous>, transform_indices = @transform_17, window_bounds = array<i64: 8, 8>}, {pipeline_mode = #tpu.pipeline_mode<synchronous>, transform_indices = @transform_18, window_bounds = array<i64: 8, 8>}, {pipeline_mode = #tpu.pipeline_mode<synchronous>, transform_indices = @transform_19, window_bounds = array<i64: 8, 8>}]} {
    %c0 = arith.constant 0 : index
    %c0_0 = arith.constant 0 : index
    %0 = vector.load %arg1[%c0, %c0_0] : memref<8x512xf32, #tpu.memory_space<vmem>>, vector<8x512xf32>
    %c0_1 = arith.constant 0 : index
    %c0_2 = arith.constant 0 : index
    %1 = vector.load %arg3[%c0_1, %c0_2] : memref<512x896xf32, #tpu.memory_space<vmem>>, vector<512x896xf32>
    %cst = arith.constant dense<0.000000e+00> : vector<8x896xf32>
    %2 = tpu.matmul %0, %1, %cst {dimension_numbers = #tpu.dot_dimension_numbers<[1], [0], [0], [1], [0, 0, 1, 1], [], []>} : vector<8x512xf32>, vector<512x896xf32>, vector<8x896xf32> -> vector<8x896xf32>
    %c0_3 = arith.constant 0 : index
    %c0_4 = arith.constant 0 : index
    %3 = vector.load %arg4[%c0_3, %c0_4] : memref<1x896xf32, #tpu.memory_space<vmem>>, vector<1x896xf32>
    %4 = vector.broadcast %3 : vector<1x896xf32> to vector<8x896xf32>
    %5 = arith.addf %2, %4 : vector<8x896xf32>
    %cst_5 = arith.constant 0.000000e+00 : f32
    %6 = vector.broadcast %cst_5 : f32 to vector<8x896xf32>
    %7 = arith.maximumf %5, %6 : vector<8x896xf32>
    %c0_6 = arith.constant 0 : index
    %c0_7 = arith.constant 0 : index
    %8 = vector.load %arg5[%c0_6, %c0_7] : memref<896x128xf32, #tpu.memory_space<vmem>>, vector<896x128xf32>
    %cst_8 = arith.constant dense<0.000000e+00> : vector<8x128xf32>
    %9 = tpu.matmul %7, %8, %cst_8 {dimension_numbers = #tpu.dot_dimension_numbers<[1], [0], [0], [1], [0, 0, 1, 1], [], []>} : vector<8x896xf32>, vector<896x128xf32>, vector<8x128xf32> -> vector<8x128xf32>
    %c0_9 = arith.constant 0 : index
    %c0_10 = arith.constant 0 : index
    %10 = vector.load %arg6[%c0_9, %c0_10] : memref<1x128xf32, #tpu.memory_space<vmem>>, vector<1x128xf32>
    %11 = vector.broadcast %10 : vector<1x128xf32> to vector<8x128xf32>
    %12 = arith.addf %9, %11 : vector<8x128xf32>
    %cst_11 = arith.constant 0.000000e+00 : f32
    %13 = vector.broadcast %cst_11 : f32 to vector<8x128xf32>
    %14 = arith.maximumf %12, %13 : vector<8x128xf32>
    %c0_12 = arith.constant 0 : index
    %c0_13 = arith.constant 0 : index
    %15 = vector.load %arg7[%c0_12, %c0_13] : memref<128x16xf32, #tpu.memory_space<vmem>>, vector<128x16xf32>
    %cst_14 = arith.constant dense<0.000000e+00> : vector<8x16xf32>
    %16 = tpu.matmul %14, %15, %cst_14 {dimension_numbers = #tpu.dot_dimension_numbers<[1], [0], [0], [1], [0, 0, 1, 1], [], []>} : vector<8x128xf32>, vector<128x16xf32>, vector<8x16xf32> -> vector<8x16xf32>
    %c0_15 = arith.constant 0 : index
    %c0_16 = arith.constant 0 : index
    %17 = vector.load %arg8[%c0_15, %c0_16] : memref<1x16xf32, #tpu.memory_space<vmem>>, vector<1x16xf32>
    %18 = vector.broadcast %17 : vector<1x16xf32> to vector<8x16xf32>
    %19 = arith.addf %16, %18 : vector<8x16xf32>
    %20 = vector.extract_strided_slice %19 {offsets = [0, 0], sizes = [8, 8], strides = [1, 1]} : vector<8x16xf32> to vector<8x8xf32>
    %21 = vector.extract_strided_slice %19 {offsets = [0, 8], sizes = [8, 8], strides = [1, 1]} : vector<8x16xf32> to vector<8x8xf32>
    %c0_17 = arith.constant 0 : index
    %c0_18 = arith.constant 0 : index
    %22 = vector.load %arg2[%c0_17, %c0_18] : memref<8x8xf32, #tpu.memory_space<vmem>>, vector<8x8xf32>
    %cst_19 = arith.constant 5.000000e-01 : f32
    %23 = vector.broadcast %cst_19 : f32 to vector<8x8xf32>
    %24 = arith.mulf %23, %21 : vector<8x8xf32>
    %25 = math.exp %24 : vector<8x8xf32>
    %26 = arith.mulf %22, %25 : vector<8x8xf32>
    %27 = arith.addf %26, %20 : vector<8x8xf32>
    %c0_20 = arith.constant 0 : index
    %c0_21 = arith.constant 0 : index
    %28 = vector.load %arg9[%c0_20, %c0_21] : memref<8x128xf32, #tpu.memory_space<vmem>>, vector<8x128xf32>
    %cst_22 = arith.constant dense<0.000000e+00> : vector<8x128xf32>
    %29 = tpu.matmul %27, %28, %cst_22 {dimension_numbers = #tpu.dot_dimension_numbers<[1], [0], [0], [1], [0, 0, 1, 1], [], []>} : vector<8x8xf32>, vector<8x128xf32>, vector<8x128xf32> -> vector<8x128xf32>
    %c0_23 = arith.constant 0 : index
    %c0_24 = arith.constant 0 : index
    %30 = vector.load %arg10[%c0_23, %c0_24] : memref<1x128xf32, #tpu.memory_space<vmem>>, vector<1x128xf32>
    %31 = vector.broadcast %30 : vector<1x128xf32> to vector<8x128xf32>
    %32 = arith.addf %29, %31 : vector<8x128xf32>
    %cst_25 = arith.constant 0.000000e+00 : f32
    %33 = vector.broadcast %cst_25 : f32 to vector<8x128xf32>
    %34 = arith.maximumf %32, %33 : vector<8x128xf32>
    %c0_26 = arith.constant 0 : index
    %c0_27 = arith.constant 0 : index
    %35 = vector.load %arg11[%c0_26, %c0_27] : memref<128x128xf32, #tpu.memory_space<vmem>>, vector<128x128xf32>
    %cst_28 = arith.constant dense<0.000000e+00> : vector<8x128xf32>
    %36 = tpu.matmul %34, %35, %cst_28 {dimension_numbers = #tpu.dot_dimension_numbers<[1], [0], [0], [1], [0, 0, 1, 1], [], []>} : vector<8x128xf32>, vector<128x128xf32>, vector<8x128xf32> -> vector<8x128xf32>
    %c0_29 = arith.constant 0 : index
    %c0_30 = arith.constant 0 : index
    %37 = vector.load %arg12[%c0_29, %c0_30] : memref<1x128xf32, #tpu.memory_space<vmem>>, vector<1x128xf32>
    %38 = vector.broadcast %37 : vector<1x128xf32> to vector<8x128xf32>
    %39 = arith.addf %36, %38 : vector<8x128xf32>
    %cst_31 = arith.constant 0.000000e+00 : f32
    %40 = vector.broadcast %cst_31 : f32 to vector<8x128xf32>
    %41 = arith.maximumf %39, %40 : vector<8x128xf32>
    %c0_32 = arith.constant 0 : index
    %c0_33 = arith.constant 0 : index
    %42 = vector.load %arg13[%c0_32, %c0_33] : memref<128x128xf32, #tpu.memory_space<vmem>>, vector<128x128xf32>
    %cst_34 = arith.constant dense<0.000000e+00> : vector<8x128xf32>
    %43 = tpu.matmul %41, %42, %cst_34 {dimension_numbers = #tpu.dot_dimension_numbers<[1], [0], [0], [1], [0, 0, 1, 1], [], []>} : vector<8x128xf32>, vector<128x128xf32>, vector<8x128xf32> -> vector<8x128xf32>
    %c0_35 = arith.constant 0 : index
    %c0_36 = arith.constant 0 : index
    %44 = vector.load %arg14[%c0_35, %c0_36] : memref<1x128xf32, #tpu.memory_space<vmem>>, vector<1x128xf32>
    %45 = vector.broadcast %44 : vector<1x128xf32> to vector<8x128xf32>
    %46 = arith.addf %43, %45 : vector<8x128xf32>
    %cst_37 = arith.constant 0.000000e+00 : f32
    %47 = vector.broadcast %cst_37 : f32 to vector<8x128xf32>
    %48 = arith.maximumf %46, %47 : vector<8x128xf32>
    %c0_38 = arith.constant 0 : index
    %c0_39 = arith.constant 0 : index
    %49 = vector.load %arg15[%c0_38, %c0_39] : memref<128x512xf32, #tpu.memory_space<vmem>>, vector<128x512xf32>
    %cst_40 = arith.constant dense<0.000000e+00> : vector<8x512xf32>
    %50 = tpu.matmul %48, %49, %cst_40 {dimension_numbers = #tpu.dot_dimension_numbers<[1], [0], [0], [1], [0, 0, 1, 1], [], []>} : vector<8x128xf32>, vector<128x512xf32>, vector<8x512xf32> -> vector<8x512xf32>
    %c0_41 = arith.constant 0 : index
    %c0_42 = arith.constant 0 : index
    %51 = vector.load %arg16[%c0_41, %c0_42] : memref<1x512xf32, #tpu.memory_space<vmem>>, vector<1x512xf32>
    %52 = vector.broadcast %51 : vector<1x512xf32> to vector<8x512xf32>
    %53 = arith.addf %50, %52 : vector<8x512xf32>
    %c0_43 = arith.constant 0 : index
    %c0_44 = arith.constant 0 : index
    %54 = vector.load %arg17[%c0_43, %c0_44] : memref<8x512xf32, #tpu.memory_space<vmem>>, vector<8x512xf32>
    tpu.vector_store %arg17[%c0_43, %c0_44], %53 {strides = array<i32>} : memref<8x512xf32, #tpu.memory_space<vmem>>, vector<8x512xf32>,
    %c0_45 = arith.constant 0 : index
    %c0_46 = arith.constant 0 : index
    %55 = vector.load %arg18[%c0_45, %c0_46] : memref<8x8xf32, #tpu.memory_space<vmem>>, vector<8x8xf32>
    tpu.vector_store %arg18[%c0_45, %c0_46], %20 {strides = array<i32>} : memref<8x8xf32, #tpu.memory_space<vmem>>, vector<8x8xf32>,
    %c0_47 = arith.constant 0 : index
    %c0_48 = arith.constant 0 : index
    %56 = vector.load %arg19[%c0_47, %c0_48] : memref<8x8xf32, #tpu.memory_space<vmem>>, vector<8x8xf32>
    tpu.vector_store %arg19[%c0_47, %c0_48], %21 {strides = array<i32>} : memref<8x8xf32, #tpu.memory_space<vmem>>, vector<8x8xf32>,
    %c0_49 = arith.constant 0 : index
    %c0_50 = arith.constant 0 : index
    %57 = vector.load %arg20[%c0_49, %c0_50] : memref<8x8xf32, #tpu.memory_space<vmem>>, vector<8x8xf32>
    tpu.vector_store %arg20[%c0_49, %c0_50], %27 {strides = array<i32>} : memref<8x8xf32, #tpu.memory_space<vmem>>, vector<8x8xf32>,
    return
  }
  func.func @transform_0(%arg0: i32) -> (i32, i32) {
    %c0_i32 = arith.constant 0 : i32
    %c0_i32_0 = arith.constant 0 : i32
    %c0_i32_1 = arith.constant 0 : i32
    return %c0_i32, %c0_i32_0 : i32, i32
  }
  func.func @transform_1(%arg0: i32) -> (i32, i32) {
    %c0_i32 = arith.constant 0 : i32
    %c0_i32_0 = arith.constant 0 : i32
    %c0_i32_1 = arith.constant 0 : i32
    return %c0_i32, %c0_i32_0 : i32, i32
  }
  func.func @transform_2(%arg0: i32) -> (i32, i32) {
    %c0_i32 = arith.constant 0 : i32
    %c0_i32_0 = arith.constant 0 : i32
    %c0_i32_1 = arith.constant 0 : i32
    return %c0_i32, %c0_i32_0 : i32, i32
  }
  func.func @transform_3(%arg0: i32) -> (i32, i32) {
    %c0_i32 = arith.constant 0 : i32
    %c0_i32_0 = arith.constant 0 : i32
    %c0_i32_1 = arith.constant 0 : i32
    return %c0_i32, %c0_i32_0 : i32, i32
  }
  func.func @transform_4(%arg0: i32) -> (i32, i32) {
    %c0_i32 = arith.constant 0 : i32
    %c0_i32_0 = arith.constant 0 : i32
    %c0_i32_1 = arith.constant 0 : i32
    return %c0_i32, %c0_i32_0 : i32, i32
  }
  func.func @transform_5(%arg0: i32) -> (i32, i32) {
    %c0_i32 = arith.constant 0 : i32
    %c0_i32_0 = arith.constant 0 : i32
    %c0_i32_1 = arith.constant 0 : i32
    return %c0_i32, %c0_i32_0 : i32, i32
  }
  func.func @transform_6(%arg0: i32) -> (i32, i32) {
    %c0_i32 = arith.constant 0 : i32
    %c0_i32_0 = arith.constant 0 : i32
    %c0_i32_1 = arith.constant 0 : i32
    return %c0_i32, %c0_i32_0 : i32, i32
  }
  func.func @transform_7(%arg0: i32) -> (i32, i32) {
    %c0_i32 = arith.constant 0 : i32
    %c0_i32_0 = arith.constant 0 : i32
    %c0_i32_1 = arith.constant 0 : i32
    return %c0_i32, %c0_i32_0 : i32, i32
  }
  func.func @transform_8(%arg0: i32) -> (i32, i32) {
    %c0_i32 = arith.constant 0 : i32
    %c0_i32_0 = arith.constant 0 : i32
    %c0_i32_1 = arith.constant 0 : i32
    return %c0_i32, %c0_i32_0 : i32, i32
  }
  func.func @transform_9(%arg0: i32) -> (i32, i32) {
    %c0_i32 = arith.constant 0 : i32
    %c0_i32_0 = arith.constant 0 : i32
    %c0_i32_1 = arith.constant 0 : i32
    return %c0_i32, %c0_i32_0 : i32, i32
  }
  func.func @transform_10(%arg0: i32) -> (i32, i32) {
    %c0_i32 = arith.constant 0 : i32
    %c0_i32_0 = arith.constant 0 : i32
    %c0_i32_1 = arith.constant 0 : i32
    return %c0_i32, %c0_i32_0 : i32, i32
  }
  func.func @transform_11(%arg0: i32) -> (i32, i32) {
    %c0_i32 = arith.constant 0 : i32
    %c0_i32_0 = arith.constant 0 : i32
    %c0_i32_1 = arith.constant 0 : i32
    return %c0_i32, %c0_i32_0 : i32, i32
  }
  func.func @transform_12(%arg0: i32) -> (i32, i32) {
    %c0_i32 = arith.constant 0 : i32
    %c0_i32_0 = arith.constant 0 : i32
    %c0_i32_1 = arith.constant 0 : i32
    return %c0_i32, %c0_i32_0 : i32, i32
  }
  func.func @transform_13(%arg0: i32) -> (i32, i32) {
    %c0_i32 = arith.constant 0 : i32
    %c0_i32_0 = arith.constant 0 : i32
    %c0_i32_1 = arith.constant 0 : i32
    return %c0_i32, %c0_i32_0 : i32, i32
  }
  func.func @transform_14(%arg0: i32) -> (i32, i32) {
    %c0_i32 = arith.constant 0 : i32
    %c0_i32_0 = arith.constant 0 : i32
    %c0_i32_1 = arith.constant 0 : i32
    return %c0_i32, %c0_i32_0 : i32, i32
  }
  func.func @transform_15(%arg0: i32) -> (i32, i32) {
    %c0_i32 = arith.constant 0 : i32
    %c0_i32_0 = arith.constant 0 : i32
    %c0_i32_1 = arith.constant 0 : i32
    return %c0_i32, %c0_i32_0 : i32, i32
  }
  func.func @transform_16(%arg0: i32) -> (i32, i32) {
    %c0_i32 = arith.constant 0 : i32
    %c0_i32_0 = arith.constant 0 : i32
    %c0_i32_1 = arith.constant 0 : i32
    return %c0_i32, %c0_i32_0 : i32, i32
  }
  func.func @transform_17(%arg0: i32) -> (i32, i32) {
    %c0_i32 = arith.constant 0 : i32
    %c0_i32_0 = arith.constant 0 : i32
    %c0_i32_1 = arith.constant 0 : i32
    return %c0_i32, %c0_i32_0 : i32, i32
  }
  func.func @transform_18(%arg0: i32) -> (i32, i32) {
    %c0_i32 = arith.constant 0 : i32
    %c0_i32_0 = arith.constant 0 : i32
    %c0_i32_1 = arith.constant 0 : i32
    return %c0_i32, %c0_i32_0 : i32, i32
  }
  func.func @transform_19(%arg0: i32) -> (i32, i32) {
    %c0_i32 = arith.constant 0 : i32
    %c0_i32_0 = arith.constant 0 : i32
    %c0_i32_1 = arith.constant 0 : i32
    return %c0_i32, %c0_i32_0 : i32, i32
  }
}

</mosaic_0001>

<llo_original>
// kernel: sdf_vae_forward.1
$region0: #{sdf_vae_forward.1}
  #allocation0 [shape = 'u32[]', space=smem, size = 0x4, offset = 0x4, fixed_abs, tag = 'smem constant byte address 0x4 - core index']
  #allocation1 [shape = 'u32[144,128]{1,0:T(1,128)}', space=vmem, size = 0x12000, scoped, tag = 'internal scratch']
  %s0 = inlined_call_operand.vmem [shape: f32[8,512], index: 0, kind: input, shape index: {}]
  %s1 = inlined_call_operand.vmem [shape: f32[8,8], index: 1, kind: input, shape index: {}]
  %s2 = inlined_call_operand.hbm [shape: f32[512,896], index: 2, kind: input, shape index: {}]
  %s3 = inlined_call_operand.hbm [shape: f32[1,896], index: 3, kind: input, shape index: {}]
  %s4 = inlined_call_operand.hbm [shape: f32[896,128], index: 4, kind: input, shape index: {}]
  %s5 = inlined_call_operand.hbm [shape: f32[1,128], index: 5, kind: input, shape index: {}]
  %s6 = inlined_call_operand.vmem [shape: f32[128,16], index: 6, kind: input, shape index: {}]
  %s7 = inlined_call_operand.hbm [shape: f32[1,16], index: 7, kind: input, shape index: {}]
  %s8 = inlined_call_operand.hbm [shape: f32[8,128], index: 8, kind: input, shape index: {}]
  %s9 = inlined_call_operand.hbm [shape: f32[1,128], index: 9, kind: input, shape index: {}]
  %s10 = inlined_call_operand.hbm [shape: f32[128,128], index: 10, kind: input, shape index: {}]
  %s11 = inlined_call_operand.hbm [shape: f32[1,128], index: 11, kind: input, shape index: {}]
  %s12 = inlined_call_operand.hbm [shape: f32[128,128], index: 12, kind: input, shape index: {}]
  %s13 = inlined_call_operand.hbm [shape: f32[1,128], index: 13, kind: input, shape index: {}]
  %s14 = inlined_call_operand.hbm [shape: f32[128,512], index: 14, kind: input, shape index: {}]
  %s15 = inlined_call_operand.hbm [shape: f32[1,512], index: 15, kind: input, shape index: {}]
  %s16 = inlined_call_operand.vmem [shape: f32[8,512], index: 16, kind: output, shape index: {0}]
  %s17 = inlined_call_operand.vmem [shape: f32[8,8], index: 17, kind: output, shape index: {1}]
  %s18 = inlined_call_operand.vmem [shape: f32[8,8], index: 18, kind: output, shape index: {2}]
  %s19 = inlined_call_operand.vmem [shape: f32[8,8], index: 19, kind: output, shape index: {3}]
  %20 = xla_tuple %s16, %s17, %s18, %s19
  %s21 = sld [smem:[#allocation0]]
  $region150: #{sdf_vae_forward.1} parent=0
    _
  %s23 = ssub.s32 1, %s21
  %s24 = scalar_select 0, %s23, %s21
  $region1: #{sdf_vae_forward.1} parent=0
    #allocation2 [shape = 'u8[1835008]{0}', space=vmem, size = 0x1c0000, scoped, tag = 'input window, operand 2, single buffered']
    #allocation3 [shape = 's32[1]{0}', space=sflag, size = 0x4, scoped, tag = 'scoped memory for sdf_vae_forward.1']
    #allocation4 [shape = 'u8[3584]{0}', space=vmem, size = 0x1000, scoped, tag = 'input window, operand 3, single buffered']
    #allocation5 [shape = 's32[1]{0}', space=sflag, size = 0x4, scoped, tag = 'scoped memory for sdf_vae_forward.1']
    #allocation6 [shape = 'u8[458752]{0}', space=vmem, size = 0x70000, scoped, tag = 'input window, operand 4, single buffered']
    #allocation7 [shape = 'u8[512]{0}', space=vmem, size = 0x400, scoped, tag = 'input window, operand 5, single buffered']
    #allocation8 [shape = 's32[1]{0}', space=sflag, size = 0x4, scoped, tag = 'scoped memory for sdf_vae_forward.1']
    #allocation9 [shape = 'u8[512]{0}', space=vmem, size = 0x400, scoped, tag = 'input window, operand 7, single buffered']
    #allocation10 [shape = 'u8[4096]{0}', space=vmem, size = 0x1000, scoped, tag = 'input window, operand 8, single buffered']
    #allocation11 [shape = 's32[1]{0}', space=sflag, size = 0x4, scoped, tag = 'scoped memory for sdf_vae_forward.1']
    #allocation12 [shape = 'u8[512]{0}', space=vmem, size = 0x400, scoped, tag = 'input window, operand 9, single buffered']
    #allocation13 [shape = 'u8[65536]{0}', space=vmem, size = 0x10000, scoped, tag = 'input window, operand 10, single buffered']
    #allocation14 [shape = 's32[1]{0}', space=sflag, size = 0x4, scoped, tag = 'scoped memory for sdf_vae_forward.1']
    #allocation15 [shape = 'u8[512]{0}', space=vmem, size = 0x400, scoped, tag = 'input window, operand 11, single buffered']
    #allocation16 [shape = 'u8[65536]{0}', space=vmem, size = 0x10000, scoped, tag = 'input window, operand 12, single buffered']
    #allocation17 [shape = 's32[1]{0}', space=sflag, size = 0x4, scoped, tag = 'scoped memory for sdf_vae_forward.1']
    #allocation18 [shape = 'u8[512]{0}', space=vmem, size = 0x400, scoped, tag = 'input window, operand 13, single buffered']
    #allocation19 [shape = 'u8[262144]{0}', space=vmem, size = 0x40000, scoped, tag = 'input window, operand 14, single buffered']
    #allocation20 [shape = 's32[1]{0}', space=sflag, size = 0x4, scoped, tag = 'scoped memory for sdf_vae_forward.1']
    #allocation21 [shape = 'u8[2048]{0}', space=vmem, size = 0x800, scoped, tag = 'input window, operand 15, single buffered']
    %25 = vsyncpa [#allocation3], 0
    %26 = vsyncpa [#allocation5], 0
    %27 = vsyncpa [#allocation8], 0
    %28 = vsyncpa [#allocation11], 0
    %29 = vsyncpa [#allocation14], 0
    %30 = vsyncpa [#allocation17], 0
    %31 = vsyncpa [#allocation20], 0
    // Predicated region
    $region2: #{sdf_vae_forward.1} parent=1 // pred_check
      _
    $region3: #{sdf_vae_forward.1} parent=1 // pred_check_branch
      %33 = sbr.rel (0) target = $region5
    $region4: #{sdf_vae_forward.1} parent=1 // pred_region
      _
    $region5: #{sdf_vae_forward.1} parent=1 // pred_fallthru
      _
    // Predicated region
    $region6: #{sdf_vae_forward.1} parent=1 // pred_check
      _
    $region7: #{sdf_vae_forward.1} parent=1 // pred_check_branch
      %35 = sbr.rel (0) target = $region9
    $region8: #{sdf_vae_forward.1} parent=1 // pred_region
      _
    $region9: #{sdf_vae_forward.1} parent=1 // pred_fallthru
      _
    // Predicated region
    $region10: #{sdf_vae_forward.1} parent=1 // pred_check
      _
    $region11: #{sdf_vae_forward.1} parent=1 // pred_check_branch
      %37 = sbr.rel (0) target = $region13
    $region12: #{sdf_vae_forward.1} parent=1 // pred_region
      %s39 = ssub.s32 57344, 57344
      %40 = vsyncadd [#allocation3], %s39
      %s41 = sshll.u32 [#allocation2], 4
      %s42 = int_to_ptr.vmem [resolvable:$true] %s41
      %47 = dma.hbm_to_vmem [thread:$0]  %s2, 57344, %s42, [#allocation3], 896, 896, 56
    $region13: #{sdf_vae_forward.1} parent=1 // pred_fallthru
      _
    // Predicated region
    $region14: #{sdf_vae_forward.1} parent=1 // pred_check
      _
    $region15: #{sdf_vae_forward.1} parent=1 // pred_check_branch
      %49 = sbr.rel (0) target = $region17
    $region16: #{sdf_vae_forward.1} parent=1 // pred_region
      %s51 = ssub.s32 112, 112
      %52 = vsyncadd [#allocation5], %s51
      %s54 = sshll.u32 [#allocation4], 4
      %s55 = int_to_ptr.vmem [resolvable:$true] %s54
      %57 = dma.hbm_to_vmem [thread:$0]  %s3, 112, %s55, [#allocation5]
    $region17: #{sdf_vae_forward.1} parent=1 // pred_fallthru
      _
    // Predicated region
    $region18: #{sdf_vae_forward.1} parent=1 // pred_check
      _
    $region19: #{sdf_vae_forward.1} parent=1 // pred_check_branch
      %59 = sbr.rel (0) target = $region21
    $region20: #{sdf_vae_forward.1} parent=1 // pred_region
      %s61 = ssub.s32 14336, 14336
      %62 = vsyncadd [#allocation5], %s61
      %s63 = sshll.u32 [#allocation6], 4
      %s64 = int_to_ptr.vmem [resolvable:$true] %s63
      %69 = dma.hbm_to_vmem [thread:$0]  %s4, 14336, %s64, [#allocation5], 128, 128, 8
    $region21: #{sdf_vae_forward.1} parent=1 // pred_fallthru
      _
    // Predicated region
    $region22: #{sdf_vae_forward.1} parent=1 // pred_check
      _
    $region23: #{sdf_vae_forward.1} parent=1 // pred_check_branch
      %71 = sbr.rel (0) target = $region25
    $region24: #{sdf_vae_forward.1} parent=1 // pred_region
      %s73 = ssub.s32 16, 16
      %74 = vsyncadd [#allocation8], %s73
      %s76 = sshll.u32 [#allocation7], 4
      %s77 = int_to_ptr.vmem [resolvable:$true] %s76
      %79 = dma.hbm_to_vmem [thread:$0]  %s5, 16, %s77, [#allocation8]
    $region25: #{sdf_vae_forward.1} parent=1 // pred_fallthru
      _
    // Predicated region
    $region26: #{sdf_vae_forward.1} parent=1 // pred_check
      _
    $region27: #{sdf_vae_forward.1} parent=1 // pred_check_branch
      %81 = sbr.rel (0) target = $region29
    $region28: #{sdf_vae_forward.1} parent=1 // pred_region
      _
    $region29: #{sdf_vae_forward.1} parent=1 // pred_fallthru
      _
    // Predicated region
    $region30: #{sdf_vae_forward.1} parent=1 // pred_check
      _
    $region31: #{sdf_vae_forward.1} parent=1 // pred_check_branch
      %83 = sbr.rel (0) target = $region33
    $region32: #{sdf_vae_forward.1} parent=1 // pred_region
      %s85 = ssub.s32 16, 16
      %86 = vsyncadd [#allocation8], %s85
      %s88 = sshll.u32 [#allocation9], 4
      %s89 = int_to_ptr.vmem [resolvable:$true] %s88
      %91 = dma.hbm_to_vmem [thread:$0]  %s7, 16, %s89, [#allocation8]
    $region33: #{sdf_vae_forward.1} parent=1 // pred_fallthru
      _
    // Predicated region
    $region34: #{sdf_vae_forward.1} parent=1 // pred_check
      _
    $region35: #{sdf_vae_forward.1} parent=1 // pred_check_branch
      %93 = sbr.rel (0) target = $region37
    $region36: #{sdf_vae_forward.1} parent=1 // pred_region
      %s95 = ssub.s32 128, 128
      %96 = vsyncadd [#allocation11], %s95
      %s98 = sshll.u32 [#allocation10], 4
      %s99 = int_to_ptr.vmem [resolvable:$true] %s98
      %101 = dma.hbm_to_vmem [thread:$0]  %s8, 128, %s99, [#allocation11]
    $region37: #{sdf_vae_forward.1} parent=1 // pred_fallthru
      _
    // Predicated region
    $region38: #{sdf_vae_forward.1} parent=1 // pred_check
      _
    $region39: #{sdf_vae_forward.1} parent=1 // pred_check_branch
      %103 = sbr.rel (0) target = $region41
    $region40: #{sdf_vae_forward.1} parent=1 // pred_region
      %s105 = ssub.s32 16, 16
      %106 = vsyncadd [#allocation11], %s105
      %s108 = sshll.u32 [#allocation12], 4
      %s109 = int_to_ptr.vmem [resolvable:$true] %s108
      %111 = dma.hbm_to_vmem [thread:$0]  %s9, 16, %s109, [#allocation11]
    $region41: #{sdf_vae_forward.1} parent=1 // pred_fallthru
      _
    // Predicated region
    $region42: #{sdf_vae_forward.1} parent=1 // pred_check
      _
    $region43: #{sdf_vae_forward.1} parent=1 // pred_check_branch
      %113 = sbr.rel (0) target = $region45
    $region44: #{sdf_vae_forward.1} parent=1 // pred_region
      %s115 = ssub.s32 2048, 2048
      %116 = vsyncadd [#allocation14], %s115
      %s117 = sshll.u32 [#allocation13], 4
      %s118 = int_to_ptr.vmem [resolvable:$true] %s117
      %123 = dma.hbm_to_vmem [thread:$0]  %s10, 2048, %s118, [#allocation14], 128, 128, 8
    $region45: #{sdf_vae_forward.1} parent=1 // pred_fallthru
      _
    // Predicated region
    $region46: #{sdf_vae_forward.1} parent=1 // pred_check
      _
    $region47: #{sdf_vae_forward.1} parent=1 // pred_check_branch
      %125 = sbr.rel (0) target = $region49
    $region48: #{sdf_vae_forward.1} parent=1 // pred_region
      %s127 = ssub.s32 16, 16
      %128 = vsyncadd [#allocation14], %s127
      %s130 = sshll.u32 [#allocation15], 4
      %s131 = int_to_ptr.vmem [resolvable:$true] %s130
      %133 = dma.hbm_to_vmem [thread:$0]  %s11, 16, %s131, [#allocation14]
    $region49: #{sdf_vae_forward.1} parent=1 // pred_fallthru
      _
    // Predicated region
    $region50: #{sdf_vae_forward.1} parent=1 // pred_check
      _
    $region51: #{sdf_vae_forward.1} parent=1 // pred_check_branch
      %135 = sbr.rel (0) target = $region53
    $region52: #{sdf_vae_forward.1} parent=1 // pred_region
      %s137 = ssub.s32 2048, 2048
      %138 = vsyncadd [#allocation17], %s137
      %s139 = sshll.u32 [#allocation16], 4
      %s140 = int_to_ptr.vmem [resolvable:$true] %s139
      %145 = dma.hbm_to_vmem [thread:$0]  %s12, 2048, %s140, [#allocation17], 128, 128, 8
    $region53: #{sdf_vae_forward.1} parent=1 // pred_fallthru
      _
    // Predicated region
    $region54: #{sdf_vae_forward.1} parent=1 // pred_check
      _
    $region55: #{sdf_vae_forward.1} parent=1 // pred_check_branch
      %147 = sbr.rel (0) target = $region57
    $region56: #{sdf_vae_forward.1} parent=1 // pred_region
      %s149 = ssub.s32 16, 16
      %150 = vsyncadd [#allocation17], %s149
      %s152 = sshll.u32 [#allocation18], 4
      %s153 = int_to_ptr.vmem [resolvable:$true] %s152
      %155 = dma.hbm_to_vmem [thread:$0]  %s13, 16, %s153, [#allocation17]
    $region57: #{sdf_vae_forward.1} parent=1 // pred_fallthru
      _
    // Predicated region
    $region58: #{sdf_vae_forward.1} parent=1 // pred_check
      _
    $region59: #{sdf_vae_forward.1} parent=1 // pred_check_branch
      %157 = sbr.rel (0) target = $region61
    $region60: #{sdf_vae_forward.1} parent=1 // pred_region
      %s159 = ssub.s32 8192, 8192
      %160 = vsyncadd [#allocation20], %s159
      %s161 = sshll.u32 [#allocation19], 4
      %s162 = int_to_ptr.vmem [resolvable:$true] %s161
      %167 = dma.hbm_to_vmem [thread:$0]  %s14, 8192, %s162, [#allocation20], 512, 512, 32
    $region61: #{sdf_vae_forward.1} parent=1 // pred_fallthru
      _
    // Predicated region
    $region62: #{sdf_vae_forward.1} parent=1 // pred_check
      _
    $region63: #{sdf_vae_forward.1} parent=1 // pred_check_branch
      %169 = sbr.rel (0) target = $region65
    $region64: #{sdf_vae_forward.1} parent=1 // pred_region
      %s171 = ssub.s32 64, 64
      %172 = vsyncadd [#allocation20], %s171
      %s174 = sshll.u32 [#allocation21], 4
      %s175 = int_to_ptr.vmem [resolvable:$true] %s174
      %177 = dma.hbm_to_vmem [thread:$0]  %s15, 64, %s175, [#allocation20]
    $region65: #{sdf_vae_forward.1} parent=1 // pred_fallthru
      _
    // Predicated region
    $region66: #{sdf_vae_forward.1} parent=1 // pred_check
      _
    $region67: #{sdf_vae_forward.1} parent=1 // pred_check_branch
      %179 = sbr.rel (0) target = $region69
    $region68: #{sdf_vae_forward.1} parent=1 // pred_region
      %180 = dma.done [#allocation3], 57344
    $region69: #{sdf_vae_forward.1} parent=1 // pred_fallthru
      _
    // Predicated region
    $region70: #{sdf_vae_forward.1} parent=1 // pred_check
      _
    $region71: #{sdf_vae_forward.1} parent=1 // pred_check_branch
      %182 = sbr.rel (0) target = $region73
    $region72: #{sdf_vae_forward.1} parent=1 // pred_region
      %183 = dma.done [#allocation5], 112
    $region73: #{sdf_vae_forward.1} parent=1 // pred_fallthru
      _
    // Predicated region
    $region74: #{sdf_vae_forward.1} parent=1 // pred_check
      _
    $region75: #{sdf_vae_forward.1} parent=1 // pred_check_branch
      %185 = sbr.rel (0) target = $region77
    $region76: #{sdf_vae_forward.1} parent=1 // pred_region
      %186 = dma.done [#allocation5], 14336
    $region77: #{sdf_vae_forward.1} parent=1 // pred_fallthru
      _
    // Predicated region
    $region78: #{sdf_vae_forward.1} parent=1 // pred_check
      _
    $region79: #{sdf_vae_forward.1} parent=1 // pred_check_branch
      %188 = sbr.rel (0) target = $region81
    $region80: #{sdf_vae_forward.1} parent=1 // pred_region
      %189 = dma.done [#allocation8], 16
    $region81: #{sdf_vae_forward.1} parent=1 // pred_fallthru
      _
    // Predicated region
    $region82: #{sdf_vae_forward.1} parent=1 // pred_check
      _
    $region83: #{sdf_vae_forward.1} parent=1 // pred_check_branch
      %191 = sbr.rel (0) target = $region85
    $region84: #{sdf_vae_forward.1} parent=1 // pred_region
      %192 = dma.done [#allocation8], 16
    $region85: #{sdf_vae_forward.1} parent=1 // pred_fallthru
      _
    // Predicated region
    $region86: #{sdf_vae_forward.1} parent=1 // pred_check
      _
    $region87: #{sdf_vae_forward.1} parent=1 // pred_check_branch
      %194 = sbr.rel (0) target = $region89
    $region88: #{sdf_vae_forward.1} parent=1 // pred_region
      %195 = dma.done [#allocation11], 128
    $region89: #{sdf_vae_forward.1} parent=1 // pred_fallthru
      _
    // Predicated region
    $region90: #{sdf_vae_forward.1} parent=1 // pred_check
      _
    $region91: #{sdf_vae_forward.1} parent=1 // pred_check_branch
      %197 = sbr.rel (0) target = $region93
    $region92: #{sdf_vae_forward.1} parent=1 // pred_region
      %198 = dma.done [#allocation11], 16
    $region93: #{sdf_vae_forward.1} parent=1 // pred_fallthru
      _
    // Predicated region
    $region94: #{sdf_vae_forward.1} parent=1 // pred_check
      _
    $region95: #{sdf_vae_forward.1} parent=1 // pred_check_branch
      %200 = sbr.rel (0) target = $region97
    $region96: #{sdf_vae_forward.1} parent=1 // pred_region
      %201 = dma.done [#allocation14], 2048
    $region97: #{sdf_vae_forward.1} parent=1 // pred_fallthru
      _
    // Predicated region
    $region98: #{sdf_vae_forward.1} parent=1 // pred_check
      _
    $region99: #{sdf_vae_forward.1} parent=1 // pred_check_branch
      %203 = sbr.rel (0) target = $region101
    $region100: #{sdf_vae_forward.1} parent=1 // pred_region
      %204 = dma.done [#allocation14], 16
    $region101: #{sdf_vae_forward.1} parent=1 // pred_fallthru
      _
    // Predicated region
    $region102: #{sdf_vae_forward.1} parent=1 // pred_check
      _
    $region103: #{sdf_vae_forward.1} parent=1 // pred_check_branch
      %206 = sbr.rel (0) target = $region105
    $region104: #{sdf_vae_forward.1} parent=1 // pred_region
      %207 = dma.done [#allocation17], 2048
    $region105: #{sdf_vae_forward.1} parent=1 // pred_fallthru
      _
    // Predicated region
    $region106: #{sdf_vae_forward.1} parent=1 // pred_check
      _
    $region107: #{sdf_vae_forward.1} parent=1 // pred_check_branch
      %209 = sbr.rel (0) target = $region109
    $region108: #{sdf_vae_forward.1} parent=1 // pred_region
      %210 = dma.done [#allocation17], 16
    $region109: #{sdf_vae_forward.1} parent=1 // pred_fallthru
      _
    // Predicated region
    $region110: #{sdf_vae_forward.1} parent=1 // pred_check
      _
    $region111: #{sdf_vae_forward.1} parent=1 // pred_check_branch
      %212 = sbr.rel (0) target = $region113
    $region112: #{sdf_vae_forward.1} parent=1 // pred_region
      %213 = dma.done [#allocation20], 8192
    $region113: #{sdf_vae_forward.1} parent=1 // pred_fallthru
      _
    // Predicated region
    $region114: #{sdf_vae_forward.1} parent=1 // pred_check
      _
    $region115: #{sdf_vae_forward.1} parent=1 // pred_check_branch
      %215 = sbr.rel (0) target = $region117
    $region116: #{sdf_vae_forward.1} parent=1 // pred_region
      %216 = dma.done [#allocation20], 64
    $region117: #{sdf_vae_forward.1} parent=1 // pred_fallthru
      _
    %v217 = vld [vmem:[%s0] sm:$0xff]
    %v218 = vld [vmem:[%s0 + $0x8] sm:$0xff]
    %v219 = vld [vmem:[%s0 + $0x10] sm:$0xff]
    %v220 = vld [vmem:[%s0 + $0x18] sm:$0xff]
    %v221 = vld [vmem:[#allocation2] sm:$0xff]
    %v222 = vld [vmem:[#allocation2 + $0x8] sm:$0xff]
    %v223 = vld [vmem:[#allocation2 + $0x10] sm:$0xff]
    %v224 = vld [vmem:[#allocation2 + $0x18] sm:$0xff]
    %v225 = vld [vmem:[#allocation2 + $0x20] sm:$0xff]
    %v226 = vld [vmem:[#allocation2 + $0x28] sm:$0xff]
    %v227 = vld [vmem:[#allocation2 + $0x30] sm:$0xff]
    %v228 = vld [vmem:[#allocation2 + $0x38] sm:$0xff]
    %v229 = vld [vmem:[#allocation2 + $0x40] sm:$0xff]
    %v230 = vld [vmem:[#allocation2 + $0x48] sm:$0xff]
    %v231 = vld [vmem:[#allocation2 + $0x50] sm:$0xff]
    %v232 = vld [vmem:[#allocation2 + $0x58] sm:$0xff]
    %v233 = vld [vmem:[#allocation2 + $0x60] sm:$0xff]
    %v234 = vld [vmem:[#allocation2 + $0x68] sm:$0xff]
    %v235 = vld [vmem:[#allocation2 + $0x70] sm:$0xff]
    %v236 = vld [vmem:[#allocation2 + $0x78] sm:$0xff]
    %v237 = vld [vmem:[#allocation2 + $0x80] sm:$0xff]
    %v238 = vld [vmem:[#allocation2 + $0x88] sm:$0xff]
    %v239 = vld [vmem:[#allocation2 + $0x90] sm:$0xff]
    %v240 = vld [vmem:[#allocation2 + $0x98] sm:$0xff]
    %v241 = vld [vmem:[#allocation2 + $0xa0] sm:$0xff]
    %v242 = vld [vmem:[#allocation2 + $0xa8] sm:$0xff]
    %v243 = vld [vmem:[#allocation2 + $0xb0] sm:$0xff]
    %v244 = vld [vmem:[#allocation2 + $0xb8] sm:$0xff]
    %v245 = vld [vmem:[#allocation2 + $0xc0] sm:$0xff]
    %v246 = vld [vmem:[#allocation2 + $0xc8] sm:$0xff]
    %v247 = vld [vmem:[#allocation2 + $0xd0] sm:$0xff]
    %v248 = vld [vmem:[#allocation2 + $0xd8] sm:$0xff]
    %v249 = vld [vmem:[#allocation2 + $0xe0] sm:$0xff]
    %v250 = vld [vmem:[#allocation2 + $0xe8] sm:$0xff]
    %v251 = vld [vmem:[#allocation2 + $0xf0] sm:$0xff]
    %v252 = vld [vmem:[#allocation2 + $0xf8] sm:$0xff]
    %v253 = vld [vmem:[#allocation2 + $0x100] sm:$0xff]
    %v254 = vld [vmem:[#allocation2 + $0x108] sm:$0xff]
    %v255 = vld [vmem:[#allocation2 + $0x110] sm:$0xff]
    %v256 = vld [vmem:[#allocation2 + $0x118] sm:$0xff]
    %v257 = vld [vmem:[#allocation2 + $0x120] sm:$0xff]
    %v258 = vld [vmem:[#allocation2 + $0x128] sm:$0xff]
    %v259 = vld [vmem:[#allocation2 + $0x130] sm:$0xff]
    %v260 = vld [vmem:[#allocation2 + $0x138] sm:$0xff]
    %v261 = vld [vmem:[#allocation2 + $0x140] sm:$0xff]
    %v262 = vld [vmem:[#allocation2 + $0x148] sm:$0xff]
    %v263 = vld [vmem:[#allocation2 + $0x150] sm:$0xff]
    %v264 = vld [vmem:[#allocation2 + $0x158] sm:$0xff]
    %v265 = vld [vmem:[#allocation2 + $0x160] sm:$0xff]
    %v266 = vld [vmem:[#allocation2 + $0x168] sm:$0xff]
    %v267 = vld [vmem:[#allocation2 + $0x170] sm:$0xff]
    %v268 = vld [vmem:[#allocation2 + $0x178] sm:$0xff]
    %v269 = vld [vmem:[#allocation2 + $0x180] sm:$0xff]
    %v270 = vld [vmem:[#allocation2 + $0x188] sm:$0xff]
    %v271 = vld [vmem:[#allocation2 + $0x190] sm:$0xff]
    %v272 = vld [vmem:[#allocation2 + $0x198] sm:$0xff]
    %v273 = vld [vmem:[#allocation2 + $0x1a0] sm:$0xff]
    %v274 = vld [vmem:[#allocation2 + $0x1a8] sm:$0xff]
    %v275 = vld [vmem:[#allocation2 + $0x1b0] sm:$0xff]
    %v276 = vld [vmem:[#allocation2 + $0x1b8] sm:$0xff]
    %v277 = vld [vmem:[#allocation2 + $0x1c0] sm:$0xff]
    %v278 = vld [vmem:[#allocation2 + $0x1c8] sm:$0xff]
    %v279 = vld [vmem:[#allocation2 + $0x1d0] sm:$0xff]
    %v280 = vld [vmem:[#allocation2 + $0x1d8] sm:$0xff]
    %v281 = vld [vmem:[#allocation2 + $0x1e0] sm:$0xff]
    %v282 = vld [vmem:[#allocation2 + $0x1e8] sm:$0xff]
    %v283 = vld [vmem:[#allocation2 + $0x1f0] sm:$0xff]
    %v284 = vld [vmem:[#allocation2 + $0x1f8] sm:$0xff]
    %v285 = vld [vmem:[#allocation2 + $0x200] sm:$0xff]
    %v286 = vld [vmem:[#allocation2 + $0x208] sm:$0xff]
    %v287 = vld [vmem:[#allocation2 + $0x210] sm:$0xff]
    %v288 = vld [vmem:[#allocation2 + $0x218] sm:$0xff]
    %v289 = vld [vmem:[#allocation2 + $0x220] sm:$0xff]
    %v290 = vld [vmem:[#allocation2 + $0x228] sm:$0xff]
    %v291 = vld [vmem:[#allocation2 + $0x230] sm:$0xff]
    %v292 = vld [vmem:[#allocation2 + $0x238] sm:$0xff]
    %v293 = vld [vmem:[#allocation2 + $0x240] sm:$0xff]
    %v294 = vld [vmem:[#allocation2 + $0x248] sm:$0xff]
    %v295 = vld [vmem:[#allocation2 + $0x250] sm:$0xff]
    %v296 = vld [vmem:[#allocation2 + $0x258] sm:$0xff]
    %v297 = vld [vmem:[#allocation2 + $0x260] sm:$0xff]
    %v298 = vld [vmem:[#allocation2 + $0x268] sm:$0xff]
    %v299 = vld [vmem:[#allocation2 + $0x270] sm:$0xff]
    %v300 = vld [vmem:[#allocation2 + $0x278] sm:$0xff]
    %v301 = vld [vmem:[#allocation2 + $0x280] sm:$0xff]
    %v302 = vld [vmem:[#allocation2 + $0x288] sm:$0xff]
    %v303 = vld [vmem:[#allocation2 + $0x290] sm:$0xff]
    %v304 = vld [vmem:[#allocation2 + $0x298] sm:$0xff]
    %v305 = vld [vmem:[#allocation2 + $0x2a0] sm:$0xff]
    %v306 = vld [vmem:[#allocation2 + $0x2a8] sm:$0xff]
    %v307 = vld [vmem:[#allocation2 + $0x2b0] sm:$0xff]
    %v308 = vld [vmem:[#allocation2 + $0x2b8] sm:$0xff]
    %v309 = vld [vmem:[#allocation2 + $0x2c0] sm:$0xff]
    %v310 = vld [vmem:[#allocation2 + $0x2c8] sm:$0xff]
    %v311 = vld [vmem:[#allocation2 + $0x2d0] sm:$0xff]
    %v312 = vld [vmem:[#allocation2 + $0x2d8] sm:$0xff]
    %v313 = vld [vmem:[#allocation2 + $0x2e0] sm:$0xff]
    %v314 = vld [vmem:[#allocation2 + $0x2e8] sm:$0xff]
    %v315 = vld [vmem:[#allocation2 + $0x2f0] sm:$0xff]
    %v316 = vld [vmem:[#allocation2 + $0x2f8] sm:$0xff]
    %v317 = vld [vmem:[#allocation2 + $0x300] sm:$0xff]
    %v318 = vld [vmem:[#allocation2 + $0x308] sm:$0xff]
    %v319 = vld [vmem:[#allocation2 + $0x310] sm:$0xff]
    %v320 = vld [vmem:[#allocation2 + $0x318] sm:$0xff]
    %v321 = vld [vmem:[#allocation2 + $0x320] sm:$0xff]
    %v322 = vld [vmem:[#allocation2 + $0x328] sm:$0xff]
    %v323 = vld [vmem:[#allocation2 + $0x330] sm:$0xff]
    %v324 = vld [vmem:[#allocation2 + $0x338] sm:$0xff]
    %v325 = vld [vmem:[#allocation2 + $0x340] sm:$0xff]
    %v326 = vld [vmem:[#allocation2 + $0x348] sm:$0xff]
    %v327 = vld [vmem:[#allocation2 + $0x350] sm:$0xff]
    %v328 = vld [vmem:[#allocation2 + $0x358] sm:$0xff]
    %v329 = vld [vmem:[#allocation2 + $0x360] sm:$0xff]
    %v330 = vld [vmem:[#allocation2 + $0x368] sm:$0xff]
    %v331 = vld [vmem:[#allocation2 + $0x370] sm:$0xff]
    %v332 = vld [vmem:[#allocation2 + $0x378] sm:$0xff]
    %v333 = vld [vmem:[#allocation2 + $0x380] sm:$0xff]
    %v334 = vld [vmem:[#allocation2 + $0x388] sm:$0xff]
    %v335 = vld [vmem:[#allocation2 + $0x390] sm:$0xff]
    %v336 = vld [vmem:[#allocation2 + $0x398] sm:$0xff]
    %v337 = vld [vmem:[#allocation2 + $0x3a0] sm:$0xff]
    %v338 = vld [vmem:[#allocation2 + $0x3a8] sm:$0xff]
    %v339 = vld [vmem:[#allocation2 + $0x3b0] sm:$0xff]
    %v340 = vld [vmem:[#allocation2 + $0x3b8] sm:$0xff]
    %v341 = vld [vmem:[#allocation2 + $0x3c0] sm:$0xff]
    %v342 = vld [vmem:[#allocation2 + $0x3c8] sm:$0xff]
    %v343 = vld [vmem:[#allocation2 + $0x3d0] sm:$0xff]
    %v344 = vld [vmem:[#allocation2 + $0x3d8] sm:$0xff]
    %v345 = vld [vmem:[#allocation2 + $0x3e0] sm:$0xff]
    %v346 = vld [vmem:[#allocation2 + $0x3e8] sm:$0xff]
    %v347 = vld [vmem:[#allocation2 + $0x3f0] sm:$0xff]
    %v348 = vld [vmem:[#allocation2 + $0x3f8] sm:$0xff]
    %v349 = vld [vmem:[#allocation2 + $0x400] sm:$0xff]
    %v350 = vld [vmem:[#allocation2 + $0x408] sm:$0xff]
    %v351 = vld [vmem:[#allocation2 + $0x410] sm:$0xff]
    %v352 = vld [vmem:[#allocation2 + $0x418] sm:$0xff]
    %v353 = vld [vmem:[#allocation2 + $0x420] sm:$0xff]
    %v354 = vld [vmem:[#allocation2 + $0x428] sm:$0xff]
    %v355 = vld [vmem:[#allocation2 + $0x430] sm:$0xff]
    %v356 = vld [vmem:[#allocation2 + $0x438] sm:$0xff]
    %v357 = vld [vmem:[#allocation2 + $0x440] sm:$0xff]
    %v358 = vld [vmem:[#allocation2 + $0x448] sm:$0xff]
    %v359 = vld [vmem:[#allocation2 + $0x450] sm:$0xff]
    %v360 = vld [vmem:[#allocation2 + $0x458] sm:$0xff]
    %v361 = vld [vmem:[#allocation2 + $0x460] sm:$0xff]
    %v362 = vld [vmem:[#allocation2 + $0x468] sm:$0xff]
    %v363 = vld [vmem:[#allocation2 + $0x470] sm:$0xff]
    %v364 = vld [vmem:[#allocation2 + $0x478] sm:$0xff]
    %v365 = vld [vmem:[#allocation2 + $0x480] sm:$0xff]
    %v366 = vld [vmem:[#allocation2 + $0x488] sm:$0xff]
    %v367 = vld [vmem:[#allocation2 + $0x490] sm:$0xff]
    %v368 = vld [vmem:[#allocation2 + $0x498] sm:$0xff]
    %v369 = vld [vmem:[#allocation2 + $0x4a0] sm:$0xff]
    %v370 = vld [vmem:[#allocation2 + $0x4a8] sm:$0xff]
    %v371 = vld [vmem:[#allocation2 + $0x4b0] sm:$0xff]
    %v372 = vld [vmem:[#allocation2 + $0x4b8] sm:$0xff]
    %v373 = vld [vmem:[#allocation2 + $0x4c0] sm:$0xff]
    %v374 = vld [vmem:[#allocation2 + $0x4c8] sm:$0xff]
    %v375 = vld [vmem:[#allocation2 + $0x4d0] sm:$0xff]
    %v376 = vld [vmem:[#allocation2 + $0x4d8] sm:$0xff]
    %v377 = vld [vmem:[#allocation2 + $0x4e0] sm:$0xff]
    %v378 = vld [vmem:[#allocation2 + $0x4e8] sm:$0xff]
    %v379 = vld [vmem:[#allocation2 + $0x4f0] sm:$0xff]
    %v380 = vld [vmem:[#allocation2 + $0x4f8] sm:$0xff]
    %v381 = vld [vmem:[#allocation2 + $0x500] sm:$0xff]
    %v382 = vld [vmem:[#allocation2 + $0x508] sm:$0xff]
    %v383 = vld [vmem:[#allocation2 + $0x510] sm:$0xff]
    %v384 = vld [vmem:[#allocation2 + $0x518] sm:$0xff]
    %v385 = vld [vmem:[#allocation2 + $0x520] sm:$0xff]
    %v386 = vld [vmem:[#allocation2 + $0x528] sm:$0xff]
    %v387 = vld [vmem:[#allocation2 + $0x530] sm:$0xff]
    %v388 = vld [vmem:[#allocation2 + $0x538] sm:$0xff]
    %v389 = vld [vmem:[#allocation2 + $0x540] sm:$0xff]
    %v390 = vld [vmem:[#allocation2 + $0x548] sm:$0xff]
    %v391 = vld [vmem:[#allocation2 + $0x550] sm:$0xff]
    %v392 = vld [vmem:[#allocation2 + $0x558] sm:$0xff]
    %v393 = vld [vmem:[#allocation2 + $0x560] sm:$0xff]
    %v394 = vld [vmem:[#allocation2 + $0x568] sm:$0xff]
    %v395 = vld [vmem:[#allocation2 + $0x570] sm:$0xff]
    %v396 = vld [vmem:[#allocation2 + $0x578] sm:$0xff]
    %v397 = vld [vmem:[#allocation2 + $0x580] sm:$0xff]
    %v398 = vld [vmem:[#allocation2 + $0x588] sm:$0xff]
    %v399 = vld [vmem:[#allocation2 + $0x590] sm:$0xff]
    %v400 = vld [vmem:[#allocation2 + $0x598] sm:$0xff]
    %v401 = vld [vmem:[#allocation2 + $0x5a0] sm:$0xff]
    %v402 = vld [vmem:[#allocation2 + $0x5a8] sm:$0xff]
    %v403 = vld [vmem:[#allocation2 + $0x5b0] sm:$0xff]
    %v404 = vld [vmem:[#allocation2 + $0x5b8] sm:$0xff]
    %v405 = vld [vmem:[#allocation2 + $0x5c0] sm:$0xff]
    %v406 = vld [vmem:[#allocation2 + $0x5c8] sm:$0xff]
    %v407 = vld [vmem:[#allocation2 + $0x5d0] sm:$0xff]
    %v408 = vld [vmem:[#allocation2 + $0x5d8] sm:$0xff]
    %v409 = vld [vmem:[#allocation2 + $0x5e0] sm:$0xff]
    %v410 = vld [vmem:[#allocation2 + $0x5e8] sm:$0xff]
    %v411 = vld [vmem:[#allocation2 + $0x5f0] sm:$0xff]
    %v412 = vld [vmem:[#allocation2 + $0x5f8] sm:$0xff]
    %v413 = vld [vmem:[#allocation2 + $0x600] sm:$0xff]
    %v414 = vld [vmem:[#allocation2 + $0x608] sm:$0xff]
    %v415 = vld [vmem:[#allocation2 + $0x610] sm:$0xff]
    %v416 = vld [vmem:[#allocation2 + $0x618] sm:$0xff]
    %v417 = vld [vmem:[#allocation2 + $0x620] sm:$0xff]
    %v418 = vld [vmem:[#allocation2 + $0x628] sm:$0xff]
    %v419 = vld [vmem:[#allocation2 + $0x630] sm:$0xff]
    %v420 = vld [vmem:[#allocation2 + $0x638] sm:$0xff]
    %v421 = vld [vmem:[#allocation2 + $0x640] sm:$0xff]
    %v422 = vld [vmem:[#allocation2 + $0x648] sm:$0xff]
    %v423 = vld [vmem:[#allocation2 + $0x650] sm:$0xff]
    %v424 = vld [vmem:[#allocation2 + $0x658] sm:$0xff]
    %v425 = vld [vmem:[#allocation2 + $0x660] sm:$0xff]
    %v426 = vld [vmem:[#allocation2 + $0x668] sm:$0xff]
    %v427 = vld [vmem:[#allocation2 + $0x670] sm:$0xff]
    %v428 = vld [vmem:[#allocation2 + $0x678] sm:$0xff]
    %v429 = vld [vmem:[#allocation2 + $0x680] sm:$0xff]
    %v430 = vld [vmem:[#allocation2 + $0x688] sm:$0xff]
    %v431 = vld [vmem:[#allocation2 + $0x690] sm:$0xff]
    %v432 = vld [vmem:[#allocation2 + $0x698] sm:$0xff]
    %v433 = vld [vmem:[#allocation2 + $0x6a0] sm:$0xff]
    %v434 = vld [vmem:[#allocation2 + $0x6a8] sm:$0xff]
    %v435 = vld [vmem:[#allocation2 + $0x6b0] sm:$0xff]
    %v436 = vld [vmem:[#allocation2 + $0x6b8] sm:$0xff]
    %v437 = vld [vmem:[#allocation2 + $0x6c0] sm:$0xff]
    %v438 = vld [vmem:[#allocation2 + $0x6c8] sm:$0xff]
    %v439 = vld [vmem:[#allocation2 + $0x6d0] sm:$0xff]
    %v440 = vld [vmem:[#allocation2 + $0x6d8] sm:$0xff]
    %v441 = vld [vmem:[#allocation2 + $0x6e0] sm:$0xff]
    %v442 = vld [vmem:[#allocation2 + $0x6e8] sm:$0xff]
    %v443 = vld [vmem:[#allocation2 + $0x6f0] sm:$0xff]
    %v444 = vld [vmem:[#allocation2 + $0x6f8] sm:$0xff]
    %v445 = vld [vmem:[#allocation2 + $0x700] sm:$0xff]
    %v446 = vld [vmem:[#allocation2 + $0x708] sm:$0xff]
    %v447 = vld [vmem:[#allocation2 + $0x710] sm:$0xff]
    %v448 = vld [vmem:[#allocation2 + $0x718] sm:$0xff]
    %v449 = vld [vmem:[#allocation2 + $0x720] sm:$0xff]
    %v450 = vld [vmem:[#allocation2 + $0x728] sm:$0xff]
    %v451 = vld [vmem:[#allocation2 + $0x730] sm:$0xff]
    %v452 = vld [vmem:[#allocation2 + $0x738] sm:$0xff]
    %v453 = vld [vmem:[#allocation2 + $0x740] sm:$0xff]
    %v454 = vld [vmem:[#allocation2 + $0x748] sm:$0xff]
    %v455 = vld [vmem:[#allocation2 + $0x750] sm:$0xff]
    %v456 = vld [vmem:[#allocation2 + $0x758] sm:$0xff]
    %v457 = vld [vmem:[#allocation2 + $0x760] sm:$0xff]
    %v458 = vld [vmem:[#allocation2 + $0x768] sm:$0xff]
    %v459 = vld [vmem:[#allocation2 + $0x770] sm:$0xff]
    %v460 = vld [vmem:[#allocation2 + $0x778] sm:$0xff]
    %v461 = vld [vmem:[#allocation2 + $0x780] sm:$0xff]
    %v462 = vld [vmem:[#allocation2 + $0x788] sm:$0xff]
    %v463 = vld [vmem:[#allocation2 + $0x790] sm:$0xff]
    %v464 = vld [vmem:[#allocation2 + $0x798] sm:$0xff]
    %v465 = vld [vmem:[#allocation2 + $0x7a0] sm:$0xff]
    %v466 = vld [vmem:[#allocation2 + $0x7a8] sm:$0xff]
    %v467 = vld [vmem:[#allocation2 + $0x7b0] sm:$0xff]
    %v468 = vld [vmem:[#allocation2 + $0x7b8] sm:$0xff]
    %v469 = vld [vmem:[#allocation2 + $0x7c0] sm:$0xff]
    %v470 = vld [vmem:[#allocation2 + $0x7c8] sm:$0xff]
    %v471 = vld [vmem:[#allocation2 + $0x7d0] sm:$0xff]
    %v472 = vld [vmem:[#allocation2 + $0x7d8] sm:$0xff]
    %v473 = vld [vmem:[#allocation2 + $0x7e0] sm:$0xff]
    %v474 = vld [vmem:[#allocation2 + $0x7e8] sm:$0xff]
    %v475 = vld [vmem:[#allocation2 + $0x7f0] sm:$0xff]
    %v476 = vld [vmem:[#allocation2 + $0x7f8] sm:$0xff]
    %v477 = vld [vmem:[#allocation2 + $0x800] sm:$0xff]
    %v478 = vld [vmem:[#allocation2 + $0x808] sm:$0xff]
    %v479 = vld [vmem:[#allocation2 + $0x810] sm:$0xff]
    %v480 = vld [vmem:[#allocation2 + $0x818] sm:$0xff]
    %v481 = vld [vmem:[#allocation2 + $0x820] sm:$0xff]
    %v482 = vld [vmem:[#allocation2 + $0x828] sm:$0xff]
    %v483 = vld [vmem:[#allocation2 + $0x830] sm:$0xff]
    %v484 = vld [vmem:[#allocation2 + $0x838] sm:$0xff]
    %v485 = vld [vmem:[#allocation2 + $0x840] sm:$0xff]
    %v486 = vld [vmem:[#allocation2 + $0x848] sm:$0xff]
    %v487 = vld [vmem:[#allocation2 + $0x850] sm:$0xff]
    %v488 = vld [vmem:[#allocation2 + $0x858] sm:$0xff]
    %v489 = vld [vmem:[#allocation2 + $0x860] sm:$0xff]
    %v490 = vld [vmem:[#allocation2 + $0x868] sm:$0xff]
    %v491 = vld [vmem:[#allocation2 + $0x870] sm:$0xff]
    %v492 = vld [vmem:[#allocation2 + $0x878] sm:$0xff]
    %v493 = vld [vmem:[#allocation2 + $0x880] sm:$0xff]
    %v494 = vld [vmem:[#allocation2 + $0x888] sm:$0xff]
    %v495 = vld [vmem:[#allocation2 + $0x890] sm:$0xff]
    %v496 = vld [vmem:[#allocation2 + $0x898] sm:$0xff]
    %v497 = vld [vmem:[#allocation2 + $0x8a0] sm:$0xff]
    %v498 = vld [vmem:[#allocation2 + $0x8a8] sm:$0xff]
    %v499 = vld [vmem:[#allocation2 + $0x8b0] sm:$0xff]
    %v500 = vld [vmem:[#allocation2 + $0x8b8] sm:$0xff]
    %v501 = vld [vmem:[#allocation2 + $0x8c0] sm:$0xff]
    %v502 = vld [vmem:[#allocation2 + $0x8c8] sm:$0xff]
    %v503 = vld [vmem:[#allocation2 + $0x8d0] sm:$0xff]
    %v504 = vld [vmem:[#allocation2 + $0x8d8] sm:$0xff]
    %v505 = vld [vmem:[#allocation2 + $0x8e0] sm:$0xff]
    %v506 = vld [vmem:[#allocation2 + $0x8e8] sm:$0xff]
    %v507 = vld [vmem:[#allocation2 + $0x8f0] sm:$0xff]
    %v508 = vld [vmem:[#allocation2 + $0x8f8] sm:$0xff]
    %v509 = vld [vmem:[#allocation2 + $0x900] sm:$0xff]
    %v510 = vld [vmem:[#allocation2 + $0x908] sm:$0xff]
    %v511 = vld [vmem:[#allocation2 + $0x910] sm:$0xff]
    %v512 = vld [vmem:[#allocation2 + $0x918] sm:$0xff]
    %v513 = vld [vmem:[#allocation2 + $0x920] sm:$0xff]
    %v514 = vld [vmem:[#allocation2 + $0x928] sm:$0xff]
    %v515 = vld [vmem:[#allocation2 + $0x930] sm:$0xff]
    %v516 = vld [vmem:[#allocation2 + $0x938] sm:$0xff]
    %v517 = vld [vmem:[#allocation2 + $0x940] sm:$0xff]
    %v518 = vld [vmem:[#allocation2 + $0x948] sm:$0xff]
    %v519 = vld [vmem:[#allocation2 + $0x950] sm:$0xff]
    %v520 = vld [vmem:[#allocation2 + $0x958] sm:$0xff]
    %v521 = vld [vmem:[#allocation2 + $0x960] sm:$0xff]
    %v522 = vld [vmem:[#allocation2 + $0x968] sm:$0xff]
    %v523 = vld [vmem:[#allocation2 + $0x970] sm:$0xff]
    %v524 = vld [vmem:[#allocation2 + $0x978] sm:$0xff]
    %v525 = vld [vmem:[#allocation2 + $0x980] sm:$0xff]
    %v526 = vld [vmem:[#allocation2 + $0x988] sm:$0xff]
    %v527 = vld [vmem:[#allocation2 + $0x990] sm:$0xff]
    %v528 = vld [vmem:[#allocation2 + $0x998] sm:$0xff]
    %v529 = vld [vmem:[#allocation2 + $0x9a0] sm:$0xff]
    %v530 = vld [vmem:[#allocation2 + $0x9a8] sm:$0xff]
    %v531 = vld [vmem:[#allocation2 + $0x9b0] sm:$0xff]
    %v532 = vld [vmem:[#allocation2 + $0x9b8] sm:$0xff]
    %v533 = vld [vmem:[#allocation2 + $0x9c0] sm:$0xff]
    %v534 = vld [vmem:[#allocation2 + $0x9c8] sm:$0xff]
    %v535 = vld [vmem:[#allocation2 + $0x9d0] sm:$0xff]
    %v536 = vld [vmem:[#allocation2 + $0x9d8] sm:$0xff]
    %v537 = vld [vmem:[#allocation2 + $0x9e0] sm:$0xff]
    %v538 = vld [vmem:[#allocation2 + $0x9e8] sm:$0xff]
    %v539 = vld [vmem:[#allocation2 + $0x9f0] sm:$0xff]
    %v540 = vld [vmem:[#allocation2 + $0x9f8] sm:$0xff]
    %v541 = vld [vmem:[#allocation2 + $0xa00] sm:$0xff]
    %v542 = vld [vmem:[#allocation2 + $0xa08] sm:$0xff]
    %v543 = vld [vmem:[#allocation2 + $0xa10] sm:$0xff]
    %v544 = vld [vmem:[#allocation2 + $0xa18] sm:$0xff]
    %v545 = vld [vmem:[#allocation2 + $0xa20] sm:$0xff]
    %v546 = vld [vmem:[#allocation2 + $0xa28] sm:$0xff]
    %v547 = vld [vmem:[#allocation2 + $0xa30] sm:$0xff]
    %v548 = vld [vmem:[#allocation2 + $0xa38] sm:$0xff]
    %v549 = vld [vmem:[#allocation2 + $0xa40] sm:$0xff]
    %v550 = vld [vmem:[#allocation2 + $0xa48] sm:$0xff]
    %v551 = vld [vmem:[#allocation2 + $0xa50] sm:$0xff]
    %v552 = vld [vmem:[#allocation2 + $0xa58] sm:$0xff]
    %v553 = vld [vmem:[#allocation2 + $0xa60] sm:$0xff]
    %v554 = vld [vmem:[#allocation2 + $0xa68] sm:$0xff]
    %v555 = vld [vmem:[#allocation2 + $0xa70] sm:$0xff]
    %v556 = vld [vmem:[#allocation2 + $0xa78] sm:$0xff]
    %v557 = vld [vmem:[#allocation2 + $0xa80] sm:$0xff]
    %v558 = vld [vmem:[#allocation2 + $0xa88] sm:$0xff]
    %v559 = vld [vmem:[#allocation2 + $0xa90] sm:$0xff]
    %v560 = vld [vmem:[#allocation2 + $0xa98] sm:$0xff]
    %v561 = vld [vmem:[#allocation2 + $0xaa0] sm:$0xff]
    %v562 = vld [vmem:[#allocation2 + $0xaa8] sm:$0xff]
    %v563 = vld [vmem:[#allocation2 + $0xab0] sm:$0xff]
    %v564 = vld [vmem:[#allocation2 + $0xab8] sm:$0xff]
    %v565 = vld [vmem:[#allocation2 + $0xac0] sm:$0xff]
    %v566 = vld [vmem:[#allocation2 + $0xac8] sm:$0xff]
    %v567 = vld [vmem:[#allocation2 + $0xad0] sm:$0xff]
    %v568 = vld [vmem:[#allocation2 + $0xad8] sm:$0xff]
    %v569 = vld [vmem:[#allocation2 + $0xae0] sm:$0xff]
    %v570 = vld [vmem:[#allocation2 + $0xae8] sm:$0xff]
    %v571 = vld [vmem:[#allocation2 + $0xaf0] sm:$0xff]
    %v572 = vld [vmem:[#allocation2 + $0xaf8] sm:$0xff]
    %v573 = vld [vmem:[#allocation2 + $0xb00] sm:$0xff]
    %v574 = vld [vmem:[#allocation2 + $0xb08] sm:$0xff]
    %v575 = vld [vmem:[#allocation2 + $0xb10] sm:$0xff]
    %v576 = vld [vmem:[#allocation2 + $0xb18] sm:$0xff]
    %v577 = vld [vmem:[#allocation2 + $0xb20] sm:$0xff]
    %v578 = vld [vmem:[#allocation2 + $0xb28] sm:$0xff]
    %v579 = vld [vmem:[#allocation2 + $0xb30] sm:$0xff]
    %v580 = vld [vmem:[#allocation2 + $0xb38] sm:$0xff]
    %v581 = vld [vmem:[#allocation2 + $0xb40] sm:$0xff]
    %v582 = vld [vmem:[#allocation2 + $0xb48] sm:$0xff]
    %v583 = vld [vmem:[#allocation2 + $0xb50] sm:$0xff]
    %v584 = vld [vmem:[#allocation2 + $0xb58] sm:$0xff]
    %v585 = vld [vmem:[#allocation2 + $0xb60] sm:$0xff]
    %v586 = vld [vmem:[#allocation2 + $0xb68] sm:$0xff]
    %v587 = vld [vmem:[#allocation2 + $0xb70] sm:$0xff]
    %v588 = vld [vmem:[#allocation2 + $0xb78] sm:$0xff]
    %v589 = vld [vmem:[#allocation2 + $0xb80] sm:$0xff]
    %v590 = vld [vmem:[#allocation2 + $0xb88] sm:$0xff]
    %v591 = vld [vmem:[#allocation2 + $0xb90] sm:$0xff]
    %v592 = vld [vmem:[#allocation2 + $0xb98] sm:$0xff]
    %v593 = vld [vmem:[#allocation2 + $0xba0] sm:$0xff]
    %v594 = vld [vmem:[#allocation2 + $0xba8] sm:$0xff]
    %v595 = vld [vmem:[#allocation2 + $0xbb0] sm:$0xff]
    %v596 = vld [vmem:[#allocation2 + $0xbb8] sm:$0xff]
    %v597 = vld [vmem:[#allocation2 + $0xbc0] sm:$0xff]
    %v598 = vld [vmem:[#allocation2 + $0xbc8] sm:$0xff]
    %v599 = vld [vmem:[#allocation2 + $0xbd0] sm:$0xff]
    %v600 = vld [vmem:[#allocation2 + $0xbd8] sm:$0xff]
    %v601 = vld [vmem:[#allocation2 + $0xbe0] sm:$0xff]
    %v602 = vld [vmem:[#allocation2 + $0xbe8] sm:$0xff]
    %v603 = vld [vmem:[#allocation2 + $0xbf0] sm:$0xff]
    %v604 = vld [vmem:[#allocation2 + $0xbf8] sm:$0xff]
    %v605 = vld [vmem:[#allocation2 + $0xc00] sm:$0xff]
    %v606 = vld [vmem:[#allocation2 + $0xc08] sm:$0xff]
    %v607 = vld [vmem:[#allocation2 + $0xc10] sm:$0xff]
    %v608 = vld [vmem:[#allocation2 + $0xc18] sm:$0xff]
    %v609 = vld [vmem:[#allocation2 + $0xc20] sm:$0xff]
    %v610 = vld [vmem:[#allocation2 + $0xc28] sm:$0xff]
    %v611 = vld [vmem:[#allocation2 + $0xc30] sm:$0xff]
    %v612 = vld [vmem:[#allocation2 + $0xc38] sm:$0xff]
    %v613 = vld [vmem:[#allocation2 + $0xc40] sm:$0xff]
    %v614 = vld [vmem:[#allocation2 + $0xc48] sm:$0xff]
    %v615 = vld [vmem:[#allocation2 + $0xc50] sm:$0xff]
    %v616 = vld [vmem:[#allocation2 + $0xc58] sm:$0xff]
    %v617 = vld [vmem:[#allocation2 + $0xc60] sm:$0xff]
    %v618 = vld [vmem:[#allocation2 + $0xc68] sm:$0xff]
    %v619 = vld [vmem:[#allocation2 + $0xc70] sm:$0xff]
    %v620 = vld [vmem:[#allocation2 + $0xc78] sm:$0xff]
    %v621 = vld [vmem:[#allocation2 + $0xc80] sm:$0xff]
    %v622 = vld [vmem:[#allocation2 + $0xc88] sm:$0xff]
    %v623 = vld [vmem:[#allocation2 + $0xc90] sm:$0xff]
    %v624 = vld [vmem:[#allocation2 + $0xc98] sm:$0xff]
    %v625 = vld [vmem:[#allocation2 + $0xca0] sm:$0xff]
    %v626 = vld [vmem:[#allocation2 + $0xca8] sm:$0xff]
    %v627 = vld [vmem:[#allocation2 + $0xcb0] sm:$0xff]
    %v628 = vld [vmem:[#allocation2 + $0xcb8] sm:$0xff]
    %v629 = vld [vmem:[#allocation2 + $0xcc0] sm:$0xff]
    %v630 = vld [vmem:[#allocation2 + $0xcc8] sm:$0xff]
    %v631 = vld [vmem:[#allocation2 + $0xcd0] sm:$0xff]
    %v632 = vld [vmem:[#allocation2 + $0xcd8] sm:$0xff]
    %v633 = vld [vmem:[#allocation2 + $0xce0] sm:$0xff]
    %v634 = vld [vmem:[#allocation2 + $0xce8] sm:$0xff]
    %v635 = vld [vmem:[#allocation2 + $0xcf0] sm:$0xff]
    %v636 = vld [vmem:[#allocation2 + $0xcf8] sm:$0xff]
    %v637 = vld [vmem:[#allocation2 + $0xd00] sm:$0xff]
    %v638 = vld [vmem:[#allocation2 + $0xd08] sm:$0xff]
    %v639 = vld [vmem:[#allocation2 + $0xd10] sm:$0xff]
    %v640 = vld [vmem:[#allocation2 + $0xd18] sm:$0xff]
    %v641 = vld [vmem:[#allocation2 + $0xd20] sm:$0xff]
    %v642 = vld [vmem:[#allocation2 + $0xd28] sm:$0xff]
    %v643 = vld [vmem:[#allocation2 + $0xd30] sm:$0xff]
    %v644 = vld [vmem:[#allocation2 + $0xd38] sm:$0xff]
    %v645 = vld [vmem:[#allocation2 + $0xd40] sm:$0xff]
    %v646 = vld [vmem:[#allocation2 + $0xd48] sm:$0xff]
    %v647 = vld [vmem:[#allocation2 + $0xd50] sm:$0xff]
    %v648 = vld [vmem:[#allocation2 + $0xd58] sm:$0xff]
    %v649 = vld [vmem:[#allocation2 + $0xd60] sm:$0xff]
    %v650 = vld [vmem:[#allocation2 + $0xd68] sm:$0xff]
    %v651 = vld [vmem:[#allocation2 + $0xd70] sm:$0xff]
    %v652 = vld [vmem:[#allocation2 + $0xd78] sm:$0xff]
    %v653 = vld [vmem:[#allocation2 + $0xd80] sm:$0xff]
    %v654 = vld [vmem:[#allocation2 + $0xd88] sm:$0xff]
    %v655 = vld [vmem:[#allocation2 + $0xd90] sm:$0xff]
    %v656 = vld [vmem:[#allocation2 + $0xd98] sm:$0xff]
    %v657 = vld [vmem:[#allocation2 + $0xda0] sm:$0xff]
    %v658 = vld [vmem:[#allocation2 + $0xda8] sm:$0xff]
    %v659 = vld [vmem:[#allocation2 + $0xdb0] sm:$0xff]
    %v660 = vld [vmem:[#allocation2 + $0xdb8] sm:$0xff]
    %v661 = vld [vmem:[#allocation2 + $0xdc0] sm:$0xff]
    %v662 = vld [vmem:[#allocation2 + $0xdc8] sm:$0xff]
    %v663 = vld [vmem:[#allocation2 + $0xdd0] sm:$0xff]
    %v664 = vld [vmem:[#allocation2 + $0xdd8] sm:$0xff]
    %v665 = vld [vmem:[#allocation2 + $0xde0] sm:$0xff]
    %v666 = vld [vmem:[#allocation2 + $0xde8] sm:$0xff]
    %v667 = vld [vmem:[#allocation2 + $0xdf0] sm:$0xff]
    %v668 = vld [vmem:[#allocation2 + $0xdf8] sm:$0xff]
    %v669 = vld [vmem:[#allocation4] sm:$0xff]
    %v671 = vlaneseq
    %v672 = vshrl.u32 %v671, 7
    %v673 = vsub.s32 0, %v672
    %v674 = vrot.slane %v669, %v673
    %v675 = vlaneseq
    %v676 = vshrl.u32 %v675, 7
    %v677 = vsub.s32 1, %v676
    %v678 = vrot.slane %v669, %v677
    %v679 = vlaneseq
    %v680 = vshrl.u32 %v679, 7
    %v681 = vsub.s32 2, %v680
    %v682 = vrot.slane %v669, %v681
    %v683 = vlaneseq
    %v684 = vshrl.u32 %v683, 7
    %v685 = vsub.s32 3, %v684
    %v686 = vrot.slane %v669, %v685
    %v687 = vlaneseq
    %v688 = vshrl.u32 %v687, 7
    %v689 = vsub.s32 4, %v688
    %v690 = vrot.slane %v669, %v689
    %v691 = vlaneseq
    %v692 = vshrl.u32 %v691, 7
    %v693 = vsub.s32 5, %v692
    %v694 = vrot.slane %v669, %v693
    %v695 = vlaneseq
    %v696 = vshrl.u32 %v695, 7
    %v697 = vsub.s32 6, %v696
    %v698 = vrot.slane %v669, %v697
    %706 = vmatprep.subr.mxu0 %v327
    %707 = vmatpush1.msra.mxu0 %v326
    %708 = vmatprep.subr.mxu0 %v320
    %709 = vmatpush1.msra.mxu0 %v319
    %710 = vmatprep.subr.mxu0 %v313
    %711 = vmatpush1.msra.mxu0 %v312
    %712 = vmatprep.subr.mxu0 %v306
    %713 = vmatpush1.msra.mxu0 %v305
    %714 = vmatprep.subr.mxu0 %v299
    %715 = vmatpush1.msra.mxu0 %v298
    %716 = vmatprep.subr.mxu0 %v292
    %717 = vmatpush1.msra.mxu0 %v291
    %718 = vmatprep.subr.mxu0 %v285
    %719 = vmatpush1.msra.mxu0 %v284
    %720 = vmatprep.subr.mxu0 %v278
    %721 = vmatpush1.msra.mxu0 %v277
    %722 = vmatprep.subr.mxu0 %v271
    %723 = vmatpush1.msra.mxu0 %v270
    %724 = vmatprep.subr.mxu0 %v264
    %725 = vmatpush1.msra.mxu0 %v263
    %726 = vmatprep.subr.mxu0 %v257
    %727 = vmatpush1.msra.mxu0 %v256
    %728 = vmatprep.subr.mxu0 %v250
    %729 = vmatpush1.msra.mxu0 %v249
    %730 = vmatprep.subr.mxu0 %v243
    %731 = vmatpush1.msra.mxu0 %v242
    %732 = vmatprep.subr.mxu0 %v236
    %733 = vmatpush1.msra.mxu0 %v235
    %734 = vmatprep.subr.mxu0 %v229
    %735 = vmatpush1.msra.mxu0 %v228
    %736 = vmatprep.subr.mxu0 %v222
    %737 = vmatpush1.msra.mxu0 %v221
    %738 = vmatprep.subr.mxu0 %v439
    %739 = vmatpush2.msra.mxu0 %v438
    %740 = vmatprep.subr.mxu0 %v432
    %741 = vmatpush2.msra.mxu0 %v431
    %742 = vmatprep.subr.mxu0 %v425
    %743 = vmatpush2.msra.mxu0 %v424
    %744 = vmatprep.subr.mxu0 %v418
    %745 = vmatpush2.msra.mxu0 %v417
    %746 = vmatprep.subr.mxu0 %v411
    %747 = vmatpush2.msra.mxu0 %v410
    %748 = vmatprep.subr.mxu0 %v404
    %749 = vmatpush2.msra.mxu0 %v403
    %750 = vmatprep.subr.mxu0 %v397
    %751 = vmatpush2.msra.mxu0 %v396
    %752 = vmatprep.subr.mxu0 %v390
    %753 = vmatpush2.msra.mxu0 %v389
    %754 = vmatprep.subr.mxu0 %v383
    %755 = vmatpush2.msra.mxu0 %v382
    %756 = vmatprep.subr.mxu0 %v376
    %757 = vmatpush2.msra.mxu0 %v375
    %758 = vmatprep.subr.mxu0 %v369
    %759 = vmatpush2.msra.mxu0 %v368
    %760 = vmatprep.subr.mxu0 %v362
    %761 = vmatpush2.msra.mxu0 %v361
    %762 = vmatprep.subr.mxu0 %v355
    %763 = vmatpush2.msra.mxu0 %v354
    %764 = vmatprep.subr.mxu0 %v348
    %765 = vmatpush2.msra.mxu0 %v347
    %766 = vmatprep.subr.mxu0 %v341
    %767 = vmatpush2.msra.mxu0 %v340
    %768 = vmatprep.subr.mxu0 %v334
    %769 = vmatpush2.msra.mxu0 %v333
    %770 = vmatprep.mubr.f32.mxu0 %v218
    %771 = vmatmul.mubr.f32.gmra.mxu0 %v217
    %v772 = vpop.f32.mrf.mxu0
    %v773 = vadd.f32 %v674, %v772
    %v774 = vpop.f32.mrf.mxu0
    %v775 = vadd.f32 %v678, %v774
    %776 = vdwg.mxu0
    %777 = vmatprep.subr.mxu0 %v551
    %778 = vmatpush1.msra.mxu0 %v550
    %779 = vmatprep.subr.mxu0 %v544
    %780 = vmatpush1.msra.mxu0 %v543
    %781 = vmatprep.subr.mxu0 %v537
    %782 = vmatpush1.msra.mxu0 %v536
    %783 = vmatprep.subr.mxu0 %v530
    %784 = vmatpush1.msra.mxu0 %v529
    %785 = vmatprep.subr.mxu0 %v523
    %786 = vmatpush1.msra.mxu0 %v522
    %787 = vmatprep.subr.mxu0 %v516
    %788 = vmatpush1.msra.mxu0 %v515
    %789 = vmatprep.subr.mxu0 %v509
    %790 = vmatpush1.msra.mxu0 %v508
    %791 = vmatprep.subr.mxu0 %v502
    %792 = vmatpush1.msra.mxu0 %v501
    %793 = vmatprep.subr.mxu0 %v495
    %794 = vmatpush1.msra.mxu0 %v494
    %795 = vmatprep.subr.mxu0 %v488
    %796 = vmatpush1.msra.mxu0 %v487
    %797 = vmatprep.subr.mxu0 %v481
    %798 = vmatpush1.msra.mxu0 %v480
    %799 = vmatprep.subr.mxu0 %v474
    %800 = vmatpush1.msra.mxu0 %v473
    %801 = vmatprep.subr.mxu0 %v467
    %802 = vmatpush1.msra.mxu0 %v466
    %803 = vmatprep.subr.mxu0 %v460
    %804 = vmatpush1.msra.mxu0 %v459
    %805 = vmatprep.subr.mxu0 %v453
    %806 = vmatpush1.msra.mxu0 %v452
    %807 = vmatprep.subr.mxu0 %v446
    %808 = vmatpush1.msra.mxu0 %v445
    %809 = vmatprep.subr.mxu0 %v663
    %810 = vmatpush2.msra.mxu0 %v662
    %811 = vmatprep.subr.mxu0 %v656
    %812 = vmatpush2.msra.mxu0 %v655
    %813 = vmatprep.subr.mxu0 %v649
    %814 = vmatpush2.msra.mxu0 %v648
    %815 = vmatprep.subr.mxu0 %v642
    %816 = vmatpush2.msra.mxu0 %v641
    %817 = vmatprep.subr.mxu0 %v635
    %818 = vmatpush2.msra.mxu0 %v634
    %819 = vmatprep.subr.mxu0 %v628
    %820 = vmatpush2.msra.mxu0 %v627
    %821 = vmatprep.subr.mxu0 %v621
    %822 = vmatpush2.msra.mxu0 %v620
    %823 = vmatprep.subr.mxu0 %v614
    %824 = vmatpush2.msra.mxu0 %v613
    %825 = vmatprep.subr.mxu0 %v607
    %826 = vmatpush2.msra.mxu0 %v606
    %827 = vmatprep.subr.mxu0 %v600
    %828 = vmatpush2.msra.mxu0 %v599
    %829 = vmatprep.subr.mxu0 %v593
    %830 = vmatpush2.msra.mxu0 %v592
    %831 = vmatprep.subr.mxu0 %v586
    %832 = vmatpush2.msra.mxu0 %v585
    %833 = vmatprep.subr.mxu0 %v579
    %834 = vmatpush2.msra.mxu0 %v578
    %835 = vmatprep.subr.mxu0 %v572
    %836 = vmatpush2.msra.mxu0 %v571
    %837 = vmatprep.subr.mxu0 %v565
    %838 = vmatpush2.msra.mxu0 %v564
    %839 = vmatprep.subr.mxu0 %v558
    %840 = vmatpush2.msra.mxu0 %v557
    %841 = vmatprep.mubr.f32.mxu0 %v220
    %842 = vmatmul.mubr.f32.gmra.mxu0 %v219
    %v843 = vpop.f32.mrf.mxu0
    %v844 = vadd.f32 %v773, %v843
    %v845 = vpop.f32.mrf.mxu0
    %v846 = vadd.f32 %v775, %v845
    %847 = vdwg.mxu0
    %848 = vmatprep.subr.mxu0 %v329
    %849 = vmatpush1.msra.mxu0 %v328
    %850 = vmatprep.subr.mxu0 %v322
    %851 = vmatpush1.msra.mxu0 %v321
    %852 = vmatprep.subr.mxu0 %v315
    %853 = vmatpush1.msra.mxu0 %v314
    %854 = vmatprep.subr.mxu0 %v308
    %855 = vmatpush1.msra.mxu0 %v307
    %856 = vmatprep.subr.mxu0 %v301
    %857 = vmatpush1.msra.mxu0 %v300
    %858 = vmatprep.subr.mxu0 %v294
    %859 = vmatpush1.msra.mxu0 %v293
    %860 = vmatprep.subr.mxu0 %v287
    %861 = vmatpush1.msra.mxu0 %v286
    %862 = vmatprep.subr.mxu0 %v280
    %863 = vmatpush1.msra.mxu0 %v279
    %864 = vmatprep.subr.mxu0 %v273
    %865 = vmatpush1.msra.mxu0 %v272
    %866 = vmatprep.subr.mxu0 %v266
    %867 = vmatpush1.msra.mxu0 %v265
    %868 = vmatprep.subr.mxu0 %v259
    %869 = vmatpush1.msra.mxu0 %v258
    %870 = vmatprep.subr.mxu0 %v252
    %871 = vmatpush1.msra.mxu0 %v251
    %872 = vmatprep.subr.mxu0 %v245
    %873 = vmatpush1.msra.mxu0 %v244
    %874 = vmatprep.subr.mxu0 %v238
    %875 = vmatpush1.msra.mxu0 %v237
    %876 = vmatprep.subr.mxu0 %v231
    %877 = vmatpush1.msra.mxu0 %v230
    %878 = vmatprep.subr.mxu0 %v224
    %879 = vmatpush1.msra.mxu0 %v223
    %880 = vmatprep.subr.mxu0 %v441
    %881 = vmatpush2.msra.mxu0 %v440
    %882 = vmatprep.subr.mxu0 %v434
    %883 = vmatpush2.msra.mxu0 %v433
    %884 = vmatprep.subr.mxu0 %v427
    %885 = vmatpush2.msra.mxu0 %v426
    %886 = vmatprep.subr.mxu0 %v420
    %887 = vmatpush2.msra.mxu0 %v419
    %888 = vmatprep.subr.mxu0 %v413
    %889 = vmatpush2.msra.mxu0 %v412
    %890 = vmatprep.subr.mxu0 %v406
    %891 = vmatpush2.msra.mxu0 %v405
    %892 = vmatprep.subr.mxu0 %v399
    %893 = vmatpush2.msra.mxu0 %v398
    %894 = vmatprep.subr.mxu0 %v392
    %895 = vmatpush2.msra.mxu0 %v391
    %896 = vmatprep.subr.mxu0 %v385
    %897 = vmatpush2.msra.mxu0 %v384
    %898 = vmatprep.subr.mxu0 %v378
    %899 = vmatpush2.msra.mxu0 %v377
    %900 = vmatprep.subr.mxu0 %v371
    %901 = vmatpush2.msra.mxu0 %v370
    %902 = vmatprep.subr.mxu0 %v364
    %903 = vmatpush2.msra.mxu0 %v363
    %904 = vmatprep.subr.mxu0 %v357
    %905 = vmatpush2.msra.mxu0 %v356
    %906 = vmatprep.subr.mxu0 %v350
    %907 = vmatpush2.msra.mxu0 %v349
    %908 = vmatprep.subr.mxu0 %v343
    %909 = vmatpush2.msra.mxu0 %v342
    %910 = vmatprep.subr.mxu0 %v336
    %911 = vmatpush2.msra.mxu0 %v335
    %912 = vmatprep.mubr.f32.mxu0 %v218
    %913 = vmatmul.mubr.f32.gmra.mxu0 %v217
    %v914 = vpop.f32.mrf.mxu0
    %v915 = vadd.f32 %v682, %v914
    %v916 = vpop.f32.mrf.mxu0
    %v917 = vadd.f32 %v686, %v916
    %918 = vdwg.mxu0
    %919 = vmatprep.subr.mxu0 %v553
    %920 = vmatpush1.msra.mxu0 %v552
    %921 = vmatprep.subr.mxu0 %v546
    %922 = vmatpush1.msra.mxu0 %v545
    %923 = vmatprep.subr.mxu0 %v539
    %924 = vmatpush1.msra.mxu0 %v538
    %925 = vmatprep.subr.mxu0 %v532
    %926 = vmatpush1.msra.mxu0 %v531
    %927 = vmatprep.subr.mxu0 %v525
    %928 = vmatpush1.msra.mxu0 %v524
    %929 = vmatprep.subr.mxu0 %v518
    %930 = vmatpush1.msra.mxu0 %v517
    %931 = vmatprep.subr.mxu0 %v511
    %932 = vmatpush1.msra.mxu0 %v510
    %933 = vmatprep.subr.mxu0 %v504
    %934 = vmatpush1.msra.mxu0 %v503
    %935 = vmatprep.subr.mxu0 %v497
    %936 = vmatpush1.msra.mxu0 %v496
    %937 = vmatprep.subr.mxu0 %v490
    %938 = vmatpush1.msra.mxu0 %v489
    %939 = vmatprep.subr.mxu0 %v483
    %940 = vmatpush1.msra.mxu0 %v482
    %941 = vmatprep.subr.mxu0 %v476
    %942 = vmatpush1.msra.mxu0 %v475
    %943 = vmatprep.subr.mxu0 %v469
    %944 = vmatpush1.msra.mxu0 %v468
    %945 = vmatprep.subr.mxu0 %v462
    %946 = vmatpush1.msra.mxu0 %v461
    %947 = vmatprep.subr.mxu0 %v455
    %948 = vmatpush1.msra.mxu0 %v454
    %949 = vmatprep.subr.mxu0 %v448
    %950 = vmatpush1.msra.mxu0 %v447
    %951 = vmatprep.subr.mxu0 %v665
    %952 = vmatpush2.msra.mxu0 %v664
    %953 = vmatprep.subr.mxu0 %v658
    %954 = vmatpush2.msra.mxu0 %v657
    %955 = vmatprep.subr.mxu0 %v651
    %956 = vmatpush2.msra.mxu0 %v650
    %957 = vmatprep.subr.mxu0 %v644
    %958 = vmatpush2.msra.mxu0 %v643
    %959 = vmatprep.subr.mxu0 %v637
    %960 = vmatpush2.msra.mxu0 %v636
    %961 = vmatprep.subr.mxu0 %v630
    %962 = vmatpush2.msra.mxu0 %v629
    %963 = vmatprep.subr.mxu0 %v623
    %964 = vmatpush2.msra.mxu0 %v622
    %965 = vmatprep.subr.mxu0 %v616
    %966 = vmatpush2.msra.mxu0 %v615
    %967 = vmatprep.subr.mxu0 %v609
    %968 = vmatpush2.msra.mxu0 %v608
    %969 = vmatprep.subr.mxu0 %v602
    %970 = vmatpush2.msra.mxu0 %v601
    %971 = vmatprep.subr.mxu0 %v595
    %972 = vmatpush2.msra.mxu0 %v594
    %973 = vmatprep.subr.mxu0 %v588
    %974 = vmatpush2.msra.mxu0 %v587
    %975 = vmatprep.subr.mxu0 %v581
    %976 = vmatpush2.msra.mxu0 %v580
    %977 = vmatprep.subr.mxu0 %v574
    %978 = vmatpush2.msra.mxu0 %v573
    %979 = vmatprep.subr.mxu0 %v567
    %980 = vmatpush2.msra.mxu0 %v566
    %981 = vmatprep.subr.mxu0 %v560
    %982 = vmatpush2.msra.mxu0 %v559
    %983 = vmatprep.mubr.f32.mxu0 %v220
    %984 = vmatmul.mubr.f32.gmra.mxu0 %v219
    %v985 = vpop.f32.mrf.mxu0
    %v986 = vadd.f32 %v915, %v985
    %v987 = vpop.f32.mrf.mxu0
    %v988 = vadd.f32 %v917, %v987
    %989 = vdwg.mxu0
    %990 = vmatprep.subr.mxu0 %v331
    %991 = vmatpush1.msra.mxu0 %v330
    %992 = vmatprep.subr.mxu0 %v324
    %993 = vmatpush1.msra.mxu0 %v323
    %994 = vmatprep.subr.mxu0 %v317
    %995 = vmatpush1.msra.mxu0 %v316
    %996 = vmatprep.subr.mxu0 %v310
    %997 = vmatpush1.msra.mxu0 %v309
    %998 = vmatprep.subr.mxu0 %v303
    %999 = vmatpush1.msra.mxu0 %v302
    %1000 = vmatprep.subr.mxu0 %v296
    %1001 = vmatpush1.msra.mxu0 %v295
    %1002 = vmatprep.subr.mxu0 %v289
    %1003 = vmatpush1.msra.mxu0 %v288
    %1004 = vmatprep.subr.mxu0 %v282
    %1005 = vmatpush1.msra.mxu0 %v281
    %1006 = vmatprep.subr.mxu0 %v275
    %1007 = vmatpush1.msra.mxu0 %v274
    %1008 = vmatprep.subr.mxu0 %v268
    %1009 = vmatpush1.msra.mxu0 %v267
    %1010 = vmatprep.subr.mxu0 %v261
    %1011 = vmatpush1.msra.mxu0 %v260
    %1012 = vmatprep.subr.mxu0 %v254
    %1013 = vmatpush1.msra.mxu0 %v253
    %1014 = vmatprep.subr.mxu0 %v247
    %1015 = vmatpush1.msra.mxu0 %v246
    %1016 = vmatprep.subr.mxu0 %v240
    %1017 = vmatpush1.msra.mxu0 %v239
    %1018 = vmatprep.subr.mxu0 %v233
    %1019 = vmatpush1.msra.mxu0 %v232
    %1020 = vmatprep.subr.mxu0 %v226
    %1021 = vmatpush1.msra.mxu0 %v225
    %1022 = vmatprep.subr.mxu0 %v443
    %1023 = vmatpush2.msra.mxu0 %v442
    %1024 = vmatprep.subr.mxu0 %v436
    %1025 = vmatpush2.msra.mxu0 %v435
    %1026 = vmatprep.subr.mxu0 %v429
    %1027 = vmatpush2.msra.mxu0 %v428
    %1028 = vmatprep.subr.mxu0 %v422
    %1029 = vmatpush2.msra.mxu0 %v421
    %1030 = vmatprep.subr.mxu0 %v415
    %1031 = vmatpush2.msra.mxu0 %v414
    %1032 = vmatprep.subr.mxu0 %v408
    %1033 = vmatpush2.msra.mxu0 %v407
    %1034 = vmatprep.subr.mxu0 %v401
    %1035 = vmatpush2.msra.mxu0 %v400
    %1036 = vmatprep.subr.mxu0 %v394
    %1037 = vmatpush2.msra.mxu0 %v393
    %1038 = vmatprep.subr.mxu0 %v387
    %1039 = vmatpush2.msra.mxu0 %v386
    %1040 = vmatprep.subr.mxu0 %v380
    %1041 = vmatpush2.msra.mxu0 %v379
    %1042 = vmatprep.subr.mxu0 %v373
    %1043 = vmatpush2.msra.mxu0 %v372
    %1044 = vmatprep.subr.mxu0 %v366
    %1045 = vmatpush2.msra.mxu0 %v365
    %1046 = vmatprep.subr.mxu0 %v359
    %1047 = vmatpush2.msra.mxu0 %v358
    %1048 = vmatprep.subr.mxu0 %v352
    %1049 = vmatpush2.msra.mxu0 %v351
    %1050 = vmatprep.subr.mxu0 %v345
    %1051 = vmatpush2.msra.mxu0 %v344
    %1052 = vmatprep.subr.mxu0 %v338
    %1053 = vmatpush2.msra.mxu0 %v337
    %1054 = vmatprep.mubr.f32.mxu0 %v218
    %1055 = vmatmul.mubr.f32.gmra.mxu0 %v217
    %v1056 = vpop.f32.mrf.mxu0
    %v1057 = vadd.f32 %v690, %v1056
    %v1058 = vpop.f32.mrf.mxu0
    %v1059 = vadd.f32 %v694, %v1058
    %1060 = vdwg.mxu0
    %1061 = vmatprep.subr.mxu0 %v555
    %1062 = vmatpush1.msra.mxu0 %v554
    %1063 = vmatprep.subr.mxu0 %v548
    %1064 = vmatpush1.msra.mxu0 %v547
    %1065 = vmatprep.subr.mxu0 %v541
    %1066 = vmatpush1.msra.mxu0 %v540
    %1067 = vmatprep.subr.mxu0 %v534
    %1068 = vmatpush1.msra.mxu0 %v533
    %1069 = vmatprep.subr.mxu0 %v527
    %1070 = vmatpush1.msra.mxu0 %v526
    %1071 = vmatprep.subr.mxu0 %v520
    %1072 = vmatpush1.msra.mxu0 %v519
    %1073 = vmatprep.subr.mxu0 %v513
    %1074 = vmatpush1.msra.mxu0 %v512
    %1075 = vmatprep.subr.mxu0 %v506
    %1076 = vmatpush1.msra.mxu0 %v505
    %1077 = vmatprep.subr.mxu0 %v499
    %1078 = vmatpush1.msra.mxu0 %v498
    %1079 = vmatprep.subr.mxu0 %v492
    %1080 = vmatpush1.msra.mxu0 %v491
    %1081 = vmatprep.subr.mxu0 %v485
    %1082 = vmatpush1.msra.mxu0 %v484
    %1083 = vmatprep.subr.mxu0 %v478
    %1084 = vmatpush1.msra.mxu0 %v477
    %1085 = vmatprep.subr.mxu0 %v471
    %1086 = vmatpush1.msra.mxu0 %v470
    %1087 = vmatprep.subr.mxu0 %v464
    %1088 = vmatpush1.msra.mxu0 %v463
    %1089 = vmatprep.subr.mxu0 %v457
    %1090 = vmatpush1.msra.mxu0 %v456
    %1091 = vmatprep.subr.mxu0 %v450
    %1092 = vmatpush1.msra.mxu0 %v449
    %1093 = vmatprep.subr.mxu0 %v667
    %1094 = vmatpush2.msra.mxu0 %v666
    %1095 = vmatprep.subr.mxu0 %v660
    %1096 = vmatpush2.msra.mxu0 %v659
    %1097 = vmatprep.subr.mxu0 %v653
    %1098 = vmatpush2.msra.mxu0 %v652
    %1099 = vmatprep.subr.mxu0 %v646
    %1100 = vmatpush2.msra.mxu0 %v645
    %1101 = vmatprep.subr.mxu0 %v639
    %1102 = vmatpush2.msra.mxu0 %v638
    %1103 = vmatprep.subr.mxu0 %v632
    %1104 = vmatpush2.msra.mxu0 %v631
    %1105 = vmatprep.subr.mxu0 %v625
    %1106 = vmatpush2.msra.mxu0 %v624
    %1107 = vmatprep.subr.mxu0 %v618
    %1108 = vmatpush2.msra.mxu0 %v617
    %1109 = vmatprep.subr.mxu0 %v611
    %1110 = vmatpush2.msra.mxu0 %v610
    %1111 = vmatprep.subr.mxu0 %v604
    %1112 = vmatpush2.msra.mxu0 %v603
    %1113 = vmatprep.subr.mxu0 %v597
    %1114 = vmatpush2.msra.mxu0 %v596
    %1115 = vmatprep.subr.mxu0 %v590
    %1116 = vmatpush2.msra.mxu0 %v589
    %1117 = vmatprep.subr.mxu0 %v583
    %1118 = vmatpush2.msra.mxu0 %v582
    %1119 = vmatprep.subr.mxu0 %v576
    %1120 = vmatpush2.msra.mxu0 %v575
    %1121 = vmatprep.subr.mxu0 %v569
    %1122 = vmatpush2.msra.mxu0 %v568
    %1123 = vmatprep.subr.mxu0 %v562
    %1124 = vmatpush2.msra.mxu0 %v561
    %1125 = vmatprep.mubr.f32.mxu0 %v220
    %1126 = vmatmul.mubr.f32.gmra.mxu0 %v219
    %v1127 = vpop.f32.mrf.mxu0
    %v1128 = vadd.f32 %v1057, %v1127
    %v1129 = vpop.f32.mrf.mxu0
    %v1130 = vadd.f32 %v1059, %v1129
    %1131 = vdwg.mxu0
    %1132 = vmatprep.subr.mxu0 0.0
    %1133 = vmatpush1.msra.mxu0 %v332
    %1134 = vmatprep.subr.mxu0 0.0
    %1135 = vmatpush1.msra.mxu0 %v325
    %1136 = vmatprep.subr.mxu0 0.0
    %1137 = vmatpush1.msra.mxu0 %v318
    %1138 = vmatprep.subr.mxu0 0.0
    %1139 = vmatpush1.msra.mxu0 %v311
    %1140 = vmatprep.subr.mxu0 0.0
    %1141 = vmatpush1.msra.mxu0 %v304
    %1142 = vmatprep.subr.mxu0 0.0
    %1143 = vmatpush1.msra.mxu0 %v297
    %1144 = vmatprep.subr.mxu0 0.0
    %1145 = vmatpush1.msra.mxu0 %v290
    %1146 = vmatprep.subr.mxu0 0.0
    %1147 = vmatpush1.msra.mxu0 %v283
    %1148 = vmatprep.subr.mxu0 0.0
    %1149 = vmatpush1.msra.mxu0 %v276
    %1150 = vmatprep.subr.mxu0 0.0
    %1151 = vmatpush1.msra.mxu0 %v269
    %1152 = vmatprep.subr.mxu0 0.0
    %1153 = vmatpush1.msra.mxu0 %v262
    %1154 = vmatprep.subr.mxu0 0.0
    %1155 = vmatpush1.msra.mxu0 %v255
    %1156 = vmatprep.subr.mxu0 0.0
    %1157 = vmatpush1.msra.mxu0 %v248
    %1158 = vmatprep.subr.mxu0 0.0
    %1159 = vmatpush1.msra.mxu0 %v241
    %1160 = vmatprep.subr.mxu0 0.0
    %1161 = vmatpush1.msra.mxu0 %v234
    %1162 = vmatprep.subr.mxu0 0.0
    %1163 = vmatpush1.msra.mxu0 %v227
    %1164 = vmatprep.subr.mxu0 0.0
    %1165 = vmatpush2.msra.mxu0 %v444
    %1166 = vmatprep.subr.mxu0 0.0
    %1167 = vmatpush2.msra.mxu0 %v437
    %1168 = vmatprep.subr.mxu0 0.0
    %1169 = vmatpush2.msra.mxu0 %v430
    %1170 = vmatprep.subr.mxu0 0.0
    %1171 = vmatpush2.msra.mxu0 %v423
    %1172 = vmatprep.subr.mxu0 0.0
    %1173 = vmatpush2.msra.mxu0 %v416
    %1174 = vmatprep.subr.mxu0 0.0
    %1175 = vmatpush2.msra.mxu0 %v409
    %1176 = vmatprep.subr.mxu0 0.0
    %1177 = vmatpush2.msra.mxu0 %v402
    %1178 = vmatprep.subr.mxu0 0.0
    %1179 = vmatpush2.msra.mxu0 %v395
    %1180 = vmatprep.subr.mxu0 0.0
    %1181 = vmatpush2.msra.mxu0 %v388
    %1182 = vmatprep.subr.mxu0 0.0
    %1183 = vmatpush2.msra.mxu0 %v381
    %1184 = vmatprep.subr.mxu0 0.0
    %1185 = vmatpush2.msra.mxu0 %v374
    %1186 = vmatprep.subr.mxu0 0.0
    %1187 = vmatpush2.msra.mxu0 %v367
    %1188 = vmatprep.subr.mxu0 0.0
    %1189 = vmatpush2.msra.mxu0 %v360
    %1190 = vmatprep.subr.mxu0 0.0
    %1191 = vmatpush2.msra.mxu0 %v353
    %1192 = vmatprep.subr.mxu0 0.0
    %1193 = vmatpush2.msra.mxu0 %v346
    %1194 = vmatprep.subr.mxu0 0.0
    %1195 = vmatpush2.msra.mxu0 %v339
    %1196 = vmatprep.mubr.f32.mxu0 %v218
    %1197 = vmatmul.mubr.f32.gmra.mxu0 %v217
    %v1198 = vpop.f32.mrf.mxu0
    %v1199 = vadd.f32 %v698, %v1198
    %v1200 = vpop.f32.mrf.mxu0
    %1201 = vdwg.mxu0
    %1202 = vmatprep.subr.mxu0 0.0
    %1203 = vmatpush1.msra.mxu0 %v556
    %1204 = vmatprep.subr.mxu0 0.0
    %1205 = vmatpush1.msra.mxu0 %v549
    %1206 = vmatprep.subr.mxu0 0.0
    %1207 = vmatpush1.msra.mxu0 %v542
    %1208 = vmatprep.subr.mxu0 0.0
    %1209 = vmatpush1.msra.mxu0 %v535
    %1210 = vmatprep.subr.mxu0 0.0
    %1211 = vmatpush1.msra.mxu0 %v528
    %1212 = vmatprep.subr.mxu0 0.0
    %1213 = vmatpush1.msra.mxu0 %v521
    %1214 = vmatprep.subr.mxu0 0.0
    %1215 = vmatpush1.msra.mxu0 %v514
    %1216 = vmatprep.subr.mxu0 0.0
    %1217 = vmatpush1.msra.mxu0 %v507
    %1218 = vmatprep.subr.mxu0 0.0
    %1219 = vmatpush1.msra.mxu0 %v500
    %1220 = vmatprep.subr.mxu0 0.0
    %1221 = vmatpush1.msra.mxu0 %v493
    %1222 = vmatprep.subr.mxu0 0.0
    %1223 = vmatpush1.msra.mxu0 %v486
    %1224 = vmatprep.subr.mxu0 0.0
    %1225 = vmatpush1.msra.mxu0 %v479
    %1226 = vmatprep.subr.mxu0 0.0
    %1227 = vmatpush1.msra.mxu0 %v472
    %1228 = vmatprep.subr.mxu0 0.0
    %1229 = vmatpush1.msra.mxu0 %v465
    %1230 = vmatprep.subr.mxu0 0.0
    %1231 = vmatpush1.msra.mxu0 %v458
    %1232 = vmatprep.subr.mxu0 0.0
    %1233 = vmatpush1.msra.mxu0 %v451
    %1234 = vmatprep.subr.mxu0 0.0
    %1235 = vmatpush2.msra.mxu0 %v668
    %1236 = vmatprep.subr.mxu0 0.0
    %1237 = vmatpush2.msra.mxu0 %v661
    %1238 = vmatprep.subr.mxu0 0.0
    %1239 = vmatpush2.msra.mxu0 %v654
    %1240 = vmatprep.subr.mxu0 0.0
    %1241 = vmatpush2.msra.mxu0 %v647
    %1242 = vmatprep.subr.mxu0 0.0
    %1243 = vmatpush2.msra.mxu0 %v640
    %1244 = vmatprep.subr.mxu0 0.0
    %1245 = vmatpush2.msra.mxu0 %v633
    %1246 = vmatprep.subr.mxu0 0.0
    %1247 = vmatpush2.msra.mxu0 %v626
    %1248 = vmatprep.subr.mxu0 0.0
    %1249 = vmatpush2.msra.mxu0 %v619
    %1250 = vmatprep.subr.mxu0 0.0
    %1251 = vmatpush2.msra.mxu0 %v612
    %1252 = vmatprep.subr.mxu0 0.0
    %1253 = vmatpush2.msra.mxu0 %v605
    %1254 = vmatprep.subr.mxu0 0.0
    %1255 = vmatpush2.msra.mxu0 %v598
    %1256 = vmatprep.subr.mxu0 0.0
    %1257 = vmatpush2.msra.mxu0 %v591
    %1258 = vmatprep.subr.mxu0 0.0
    %1259 = vmatpush2.msra.mxu0 %v584
    %1260 = vmatprep.subr.mxu0 0.0
    %1261 = vmatpush2.msra.mxu0 %v577
    %1262 = vmatprep.subr.mxu0 0.0
    %1263 = vmatpush2.msra.mxu0 %v570
    %1264 = vmatprep.subr.mxu0 0.0
    %1265 = vmatpush2.msra.mxu0 %v563
    %1266 = vmatprep.mubr.f32.mxu0 %v220
    %1267 = vmatmul.mubr.f32.gmra.mxu0 %v219
    %v1268 = vpop.f32.mrf.mxu0
    %v1269 = vadd.f32 %v1199, %v1268
    %v1270 = vpop.f32.mrf.mxu0
    %1271 = vdwg.mxu0
    %v1272 = vmax.f32 %v844, 0.0
    %v1273 = vmax.f32 %v846, 0.0
    %v1274 = vmax.f32 %v986, 0.0
    %v1275 = vmax.f32 %v988, 0.0
    %v1276 = vmax.f32 %v1128, 0.0
    %v1277 = vmax.f32 %v1130, 0.0
    %v1278 = vmax.f32 %v1269, 0.0
    %v1279 = vld [vmem:[#allocation6] sm:$0xff]
    %v1280 = vld [vmem:[#allocation6 + $0x8] sm:$0xff]
    %v1281 = vld [vmem:[#allocation6 + $0x10] sm:$0xff]
    %v1282 = vld [vmem:[#allocation6 + $0x18] sm:$0xff]
    %v1283 = vld [vmem:[#allocation6 + $0x20] sm:$0xff]
    %v1284 = vld [vmem:[#allocation6 + $0x28] sm:$0xff]
    %v1285 = vld [vmem:[#allocation6 + $0x30] sm:$0xff]
    %v1286 = vld [vmem:[#allocation6 + $0x38] sm:$0xff]
    %v1287 = vld [vmem:[#allocation6 + $0x40] sm:$0xff]
    %v1288 = vld [vmem:[#allocation6 + $0x48] sm:$0xff]
    %v1289 = vld [vmem:[#allocation6 + $0x50] sm:$0xff]
    %v1290 = vld [vmem:[#allocation6 + $0x58] sm:$0xff]
    %v1291 = vld [vmem:[#allocation6 + $0x60] sm:$0xff]
    %v1292 = vld [vmem:[#allocation6 + $0x68] sm:$0xff]
    %v1293 = vld [vmem:[#allocation6 + $0x70] sm:$0xff]
    %v1294 = vld [vmem:[#allocation6 + $0x78] sm:$0xff]
    %v1295 = vld [vmem:[#allocation6 + $0x80] sm:$0xff]
    %v1296 = vld [vmem:[#allocation6 + $0x88] sm:$0xff]
    %v1297 = vld [vmem:[#allocation6 + $0x90] sm:$0xff]
    %v1298 = vld [vmem:[#allocation6 + $0x98] sm:$0xff]
    %v1299 = vld [vmem:[#allocation6 + $0xa0] sm:$0xff]
    %v1300 = vld [vmem:[#allocation6 + $0xa8] sm:$0xff]
    %v1301 = vld [vmem:[#allocation6 + $0xb0] sm:$0xff]
    %v1302 = vld [vmem:[#allocation6 + $0xb8] sm:$0xff]
    %v1303 = vld [vmem:[#allocation6 + $0xc0] sm:$0xff]
    %v1304 = vld [vmem:[#allocation6 + $0xc8] sm:$0xff]
    %v1305 = vld [vmem:[#allocation6 + $0xd0] sm:$0xff]
    %v1306 = vld [vmem:[#allocation6 + $0xd8] sm:$0xff]
    %v1307 = vld [vmem:[#allocation6 + $0xe0] sm:$0xff]
    %v1308 = vld [vmem:[#allocation6 + $0xe8] sm:$0xff]
    %v1309 = vld [vmem:[#allocation6 + $0xf0] sm:$0xff]
    %v1310 = vld [vmem:[#allocation6 + $0xf8] sm:$0xff]
    %v1311 = vld [vmem:[#allocation6 + $0x100] sm:$0xff]
    %v1312 = vld [vmem:[#allocation6 + $0x108] sm:$0xff]
    %v1313 = vld [vmem:[#allocation6 + $0x110] sm:$0xff]
    %v1314 = vld [vmem:[#allocation6 + $0x118] sm:$0xff]
    %v1315 = vld [vmem:[#allocation6 + $0x120] sm:$0xff]
    %v1316 = vld [vmem:[#allocation6 + $0x128] sm:$0xff]
    %v1317 = vld [vmem:[#allocation6 + $0x130] sm:$0xff]
    %v1318 = vld [vmem:[#allocation6 + $0x138] sm:$0xff]
    %v1319 = vld [vmem:[#allocation6 + $0x140] sm:$0xff]
    %v1320 = vld [vmem:[#allocation6 + $0x148] sm:$0xff]
    %v1321 = vld [vmem:[#allocation6 + $0x150] sm:$0xff]
    %v1322 = vld [vmem:[#allocation6 + $0x158] sm:$0xff]
    %v1323 = vld [vmem:[#allocation6 + $0x160] sm:$0xff]
    %v1324 = vld [vmem:[#allocation6 + $0x168] sm:$0xff]
    %v1325 = vld [vmem:[#allocation6 + $0x170] sm:$0xff]
    %v1326 = vld [vmem:[#allocation6 + $0x178] sm:$0xff]
    %v1327 = vld [vmem:[#allocation6 + $0x180] sm:$0xff]
    %v1328 = vld [vmem:[#allocation6 + $0x188] sm:$0xff]
    %v1329 = vld [vmem:[#allocation6 + $0x190] sm:$0xff]
    %v1330 = vld [vmem:[#allocation6 + $0x198] sm:$0xff]
    %v1331 = vld [vmem:[#allocation6 + $0x1a0] sm:$0xff]
    %v1332 = vld [vmem:[#allocation6 + $0x1a8] sm:$0xff]
    %v1333 = vld [vmem:[#allocation6 + $0x1b0] sm:$0xff]
    %v1334 = vld [vmem:[#allocation6 + $0x1b8] sm:$0xff]
    %v1335 = vld [vmem:[#allocation6 + $0x1c0] sm:$0xff]
    %v1336 = vld [vmem:[#allocation6 + $0x1c8] sm:$0xff]
    %v1337 = vld [vmem:[#allocation6 + $0x1d0] sm:$0xff]
    %v1338 = vld [vmem:[#allocation6 + $0x1d8] sm:$0xff]
    %v1339 = vld [vmem:[#allocation6 + $0x1e0] sm:$0xff]
    %v1340 = vld [vmem:[#allocation6 + $0x1e8] sm:$0xff]
    %v1341 = vld [vmem:[#allocation6 + $0x1f0] sm:$0xff]
    %v1342 = vld [vmem:[#allocation6 + $0x1f8] sm:$0xff]
    %v1343 = vld [vmem:[#allocation6 + $0x200] sm:$0xff]
    %v1344 = vld [vmem:[#allocation6 + $0x208] sm:$0xff]
    %v1345 = vld [vmem:[#allocation6 + $0x210] sm:$0xff]
    %v1346 = vld [vmem:[#allocation6 + $0x218] sm:$0xff]
    %v1347 = vld [vmem:[#allocation6 + $0x220] sm:$0xff]
    %v1348 = vld [vmem:[#allocation6 + $0x228] sm:$0xff]
    %v1349 = vld [vmem:[#allocation6 + $0x230] sm:$0xff]
    %v1350 = vld [vmem:[#allocation6 + $0x238] sm:$0xff]
    %v1351 = vld [vmem:[#allocation6 + $0x240] sm:$0xff]
    %v1352 = vld [vmem:[#allocation6 + $0x248] sm:$0xff]
    %v1353 = vld [vmem:[#allocation6 + $0x250] sm:$0xff]
    %v1354 = vld [vmem:[#allocation6 + $0x258] sm:$0xff]
    %v1355 = vld [vmem:[#allocation6 + $0x260] sm:$0xff]
    %v1356 = vld [vmem:[#allocation6 + $0x268] sm:$0xff]
    %v1357 = vld [vmem:[#allocation6 + $0x270] sm:$0xff]
    %v1358 = vld [vmem:[#allocation6 + $0x278] sm:$0xff]
    %v1359 = vld [vmem:[#allocation6 + $0x280] sm:$0xff]
    %v1360 = vld [vmem:[#allocation6 + $0x288] sm:$0xff]
    %v1361 = vld [vmem:[#allocation6 + $0x290] sm:$0xff]
    %v1362 = vld [vmem:[#allocation6 + $0x298] sm:$0xff]
    %v1363 = vld [vmem:[#allocation6 + $0x2a0] sm:$0xff]
    %v1364 = vld [vmem:[#allocation6 + $0x2a8] sm:$0xff]
    %v1365 = vld [vmem:[#allocation6 + $0x2b0] sm:$0xff]
    %v1366 = vld [vmem:[#allocation6 + $0x2b8] sm:$0xff]
    %v1367 = vld [vmem:[#allocation6 + $0x2c0] sm:$0xff]
    %v1368 = vld [vmem:[#allocation6 + $0x2c8] sm:$0xff]
    %v1369 = vld [vmem:[#allocation6 + $0x2d0] sm:$0xff]
    %v1370 = vld [vmem:[#allocation6 + $0x2d8] sm:$0xff]
    %v1371 = vld [vmem:[#allocation6 + $0x2e0] sm:$0xff]
    %v1372 = vld [vmem:[#allocation6 + $0x2e8] sm:$0xff]
    %v1373 = vld [vmem:[#allocation6 + $0x2f0] sm:$0xff]
    %v1374 = vld [vmem:[#allocation6 + $0x2f8] sm:$0xff]
    %v1375 = vld [vmem:[#allocation6 + $0x300] sm:$0xff]
    %v1376 = vld [vmem:[#allocation6 + $0x308] sm:$0xff]
    %v1377 = vld [vmem:[#allocation6 + $0x310] sm:$0xff]
    %v1378 = vld [vmem:[#allocation6 + $0x318] sm:$0xff]
    %v1379 = vld [vmem:[#allocation6 + $0x320] sm:$0xff]
    %v1380 = vld [vmem:[#allocation6 + $0x328] sm:$0xff]
    %v1381 = vld [vmem:[#allocation6 + $0x330] sm:$0xff]
    %v1382 = vld [vmem:[#allocation6 + $0x338] sm:$0xff]
    %v1383 = vld [vmem:[#allocation6 + $0x340] sm:$0xff]
    %v1384 = vld [vmem:[#allocation6 + $0x348] sm:$0xff]
    %v1385 = vld [vmem:[#allocation6 + $0x350] sm:$0xff]
    %v1386 = vld [vmem:[#allocation6 + $0x358] sm:$0xff]
    %v1387 = vld [vmem:[#allocation6 + $0x360] sm:$0xff]
    %v1388 = vld [vmem:[#allocation6 + $0x368] sm:$0xff]
    %v1389 = vld [vmem:[#allocation6 + $0x370] sm:$0xff]
    %v1390 = vld [vmem:[#allocation6 + $0x378] sm:$0xff]
    %v1391 = vld [vmem:[#allocation7] sm:$0x1]
    %v1393 = vlaneseq
    %v1394 = vshrl.u32 %v1393, 7
    %v1395 = vsub.s32 0, %v1394
    %v1396 = vrot.slane %v1391, %v1395
    %1398 = vmatprep.subr.mxu0 0.0
    %1399 = vmatpush1.msra.mxu0 %v1294
    %1400 = vmatprep.subr.mxu0 0.0
    %1401 = vmatpush1.msra.mxu0 %v1293
    %1402 = vmatprep.subr.mxu0 0.0
    %1403 = vmatpush1.msra.mxu0 %v1292
    %1404 = vmatprep.subr.mxu0 0.0
    %1405 = vmatpush1.msra.mxu0 %v1291
    %1406 = vmatprep.subr.mxu0 0.0
    %1407 = vmatpush1.msra.mxu0 %v1290
    %1408 = vmatprep.subr.mxu0 0.0
    %1409 = vmatpush1.msra.mxu0 %v1289
    %1410 = vmatprep.subr.mxu0 0.0
    %1411 = vmatpush1.msra.mxu0 %v1288
    %1412 = vmatprep.subr.mxu0 0.0
    %1413 = vmatpush1.msra.mxu0 %v1287
    %1414 = vmatprep.subr.mxu0 0.0
    %1415 = vmatpush1.msra.mxu0 %v1286
    %1416 = vmatprep.subr.mxu0 0.0
    %1417 = vmatpush1.msra.mxu0 %v1285
    %1418 = vmatprep.subr.mxu0 0.0
    %1419 = vmatpush1.msra.mxu0 %v1284
    %1420 = vmatprep.subr.mxu0 0.0
    %1421 = vmatpush1.msra.mxu0 %v1283
    %1422 = vmatprep.subr.mxu0 0.0
    %1423 = vmatpush1.msra.mxu0 %v1282
    %1424 = vmatprep.subr.mxu0 0.0
    %1425 = vmatpush1.msra.mxu0 %v1281
    %1426 = vmatprep.subr.mxu0 0.0
    %1427 = vmatpush1.msra.mxu0 %v1280
    %1428 = vmatprep.subr.mxu0 0.0
    %1429 = vmatpush1.msra.mxu0 %v1279
    %1430 = vmatprep.subr.mxu0 0.0
    %1431 = vmatpush2.msra.mxu0 %v1310
    %1432 = vmatprep.subr.mxu0 0.0
    %1433 = vmatpush2.msra.mxu0 %v1309
    %1434 = vmatprep.subr.mxu0 0.0
    %1435 = vmatpush2.msra.mxu0 %v1308
    %1436 = vmatprep.subr.mxu0 0.0
    %1437 = vmatpush2.msra.mxu0 %v1307
    %1438 = vmatprep.subr.mxu0 0.0
    %1439 = vmatpush2.msra.mxu0 %v1306
    %1440 = vmatprep.subr.mxu0 0.0
    %1441 = vmatpush2.msra.mxu0 %v1305
    %1442 = vmatprep.subr.mxu0 0.0
    %1443 = vmatpush2.msra.mxu0 %v1304
    %1444 = vmatprep.subr.mxu0 0.0
    %1445 = vmatpush2.msra.mxu0 %v1303
    %1446 = vmatprep.subr.mxu0 0.0
    %1447 = vmatpush2.msra.mxu0 %v1302
    %1448 = vmatprep.subr.mxu0 0.0
    %1449 = vmatpush2.msra.mxu0 %v1301
    %1450 = vmatprep.subr.mxu0 0.0
    %1451 = vmatpush2.msra.mxu0 %v1300
    %1452 = vmatprep.subr.mxu0 0.0
    %1453 = vmatpush2.msra.mxu0 %v1299
    %1454 = vmatprep.subr.mxu0 0.0
    %1455 = vmatpush2.msra.mxu0 %v1298
    %1456 = vmatprep.subr.mxu0 0.0
    %1457 = vmatpush2.msra.mxu0 %v1297
    %1458 = vmatprep.subr.mxu0 0.0
    %1459 = vmatpush2.msra.mxu0 %v1296
    %1460 = vmatprep.subr.mxu0 0.0
    %1461 = vmatpush2.msra.mxu0 %v1295
    %1462 = vmatprep.mubr.f32.mxu0 %v1273
    %1463 = vmatmul.mubr.f32.gmra.mxu0 %v1272
    %v1464 = vpop.f32.mrf.mxu0
    %v1465 = vadd.f32 %v1396, %v1464
    %v1466 = vpop.f32.mrf.mxu0
    %1467 = vdwg.mxu0
    %1468 = vmatprep.subr.mxu0 0.0
    %1469 = vmatpush1.msra.mxu0 %v1326
    %1470 = vmatprep.subr.mxu0 0.0
    %1471 = vmatpush1.msra.mxu0 %v1325
    %1472 = vmatprep.subr.mxu0 0.0
    %1473 = vmatpush1.msra.mxu0 %v1324
    %1474 = vmatprep.subr.mxu0 0.0
    %1475 = vmatpush1.msra.mxu0 %v1323
    %1476 = vmatprep.subr.mxu0 0.0
    %1477 = vmatpush1.msra.mxu0 %v1322
    %1478 = vmatprep.subr.mxu0 0.0
    %1479 = vmatpush1.msra.mxu0 %v1321
    %1480 = vmatprep.subr.mxu0 0.0
    %1481 = vmatpush1.msra.mxu0 %v1320
    %1482 = vmatprep.subr.mxu0 0.0
    %1483 = vmatpush1.msra.mxu0 %v1319
    %1484 = vmatprep.subr.mxu0 0.0
    %1485 = vmatpush1.msra.mxu0 %v1318
    %1486 = vmatprep.subr.mxu0 0.0
    %1487 = vmatpush1.msra.mxu0 %v1317
    %1488 = vmatprep.subr.mxu0 0.0
    %1489 = vmatpush1.msra.mxu0 %v1316
    %1490 = vmatprep.subr.mxu0 0.0
    %1491 = vmatpush1.msra.mxu0 %v1315
    %1492 = vmatprep.subr.mxu0 0.0
    %1493 = vmatpush1.msra.mxu0 %v1314
    %1494 = vmatprep.subr.mxu0 0.0
    %1495 = vmatpush1.msra.mxu0 %v1313
    %1496 = vmatprep.subr.mxu0 0.0
    %1497 = vmatpush1.msra.mxu0 %v1312
    %1498 = vmatprep.subr.mxu0 0.0
    %1499 = vmatpush1.msra.mxu0 %v1311
    %1500 = vmatprep.subr.mxu0 0.0
    %1501 = vmatpush2.msra.mxu0 %v1342
    %1502 = vmatprep.subr.mxu0 0.0
    %1503 = vmatpush2.msra.mxu0 %v1341
    %1504 = vmatprep.subr.mxu0 0.0
    %1505 = vmatpush2.msra.mxu0 %v1340
    %1506 = vmatprep.subr.mxu0 0.0
    %1507 = vmatpush2.msra.mxu0 %v1339
    %1508 = vmatprep.subr.mxu0 0.0
    %1509 = vmatpush2.msra.mxu0 %v1338
    %1510 = vmatprep.subr.mxu0 0.0
    %1511 = vmatpush2.msra.mxu0 %v1337
    %1512 = vmatprep.subr.mxu0 0.0
    %1513 = vmatpush2.msra.mxu0 %v1336
    %1514 = vmatprep.subr.mxu0 0.0
    %1515 = vmatpush2.msra.mxu0 %v1335
    %1516 = vmatprep.subr.mxu0 0.0
    %1517 = vmatpush2.msra.mxu0 %v1334
    %1518 = vmatprep.subr.mxu0 0.0
    %1519 = vmatpush2.msra.mxu0 %v1333
    %1520 = vmatprep.subr.mxu0 0.0
    %1521 = vmatpush2.msra.mxu0 %v1332
    %1522 = vmatprep.subr.mxu0 0.0
    %1523 = vmatpush2.msra.mxu0 %v1331
    %1524 = vmatprep.subr.mxu0 0.0
    %1525 = vmatpush2.msra.mxu0 %v1330
    %1526 = vmatprep.subr.mxu0 0.0
    %1527 = vmatpush2.msra.mxu0 %v1329
    %1528 = vmatprep.subr.mxu0 0.0
    %1529 = vmatpush2.msra.mxu0 %v1328
    %1530 = vmatprep.subr.mxu0 0.0
    %1531 = vmatpush2.msra.mxu0 %v1327
    %1532 = vmatprep.mubr.f32.mxu0 %v1275
    %1533 = vmatmul.mubr.f32.gmra.mxu0 %v1274
    %v1534 = vpop.f32.mrf.mxu0
    %v1535 = vadd.f32 %v1465, %v1534
    %v1536 = vpop.f32.mrf.mxu0
    %1537 = vdwg.mxu0
    %1538 = vmatprep.subr.mxu0 0.0
    %1539 = vmatpush1.msra.mxu0 %v1358
    %1540 = vmatprep.subr.mxu0 0.0
    %1541 = vmatpush1.msra.mxu0 %v1357
    %1542 = vmatprep.subr.mxu0 0.0
    %1543 = vmatpush1.msra.mxu0 %v1356
    %1544 = vmatprep.subr.mxu0 0.0
    %1545 = vmatpush1.msra.mxu0 %v1355
    %1546 = vmatprep.subr.mxu0 0.0
    %1547 = vmatpush1.msra.mxu0 %v1354
    %1548 = vmatprep.subr.mxu0 0.0
    %1549 = vmatpush1.msra.mxu0 %v1353
    %1550 = vmatprep.subr.mxu0 0.0
    %1551 = vmatpush1.msra.mxu0 %v1352
    %1552 = vmatprep.subr.mxu0 0.0
    %1553 = vmatpush1.msra.mxu0 %v1351
    %1554 = vmatprep.subr.mxu0 0.0
    %1555 = vmatpush1.msra.mxu0 %v1350
    %1556 = vmatprep.subr.mxu0 0.0
    %1557 = vmatpush1.msra.mxu0 %v1349
    %1558 = vmatprep.subr.mxu0 0.0
    %1559 = vmatpush1.msra.mxu0 %v1348
    %1560 = vmatprep.subr.mxu0 0.0
    %1561 = vmatpush1.msra.mxu0 %v1347
    %1562 = vmatprep.subr.mxu0 0.0
    %1563 = vmatpush1.msra.mxu0 %v1346
    %1564 = vmatprep.subr.mxu0 0.0
    %1565 = vmatpush1.msra.mxu0 %v1345
    %1566 = vmatprep.subr.mxu0 0.0
    %1567 = vmatpush1.msra.mxu0 %v1344
    %1568 = vmatprep.subr.mxu0 0.0
    %1569 = vmatpush1.msra.mxu0 %v1343
    %1570 = vmatprep.subr.mxu0 0.0
    %1571 = vmatpush2.msra.mxu0 %v1374
    %1572 = vmatprep.subr.mxu0 0.0
    %1573 = vmatpush2.msra.mxu0 %v1373
    %1574 = vmatprep.subr.mxu0 0.0
    %1575 = vmatpush2.msra.mxu0 %v1372
    %1576 = vmatprep.subr.mxu0 0.0
    %1577 = vmatpush2.msra.mxu0 %v1371
    %1578 = vmatprep.subr.mxu0 0.0
    %1579 = vmatpush2.msra.mxu0 %v1370
    %1580 = vmatprep.subr.mxu0 0.0
    %1581 = vmatpush2.msra.mxu0 %v1369
    %1582 = vmatprep.subr.mxu0 0.0
    %1583 = vmatpush2.msra.mxu0 %v1368
    %1584 = vmatprep.subr.mxu0 0.0
    %1585 = vmatpush2.msra.mxu0 %v1367
    %1586 = vmatprep.subr.mxu0 0.0
    %1587 = vmatpush2.msra.mxu0 %v1366
    %1588 = vmatprep.subr.mxu0 0.0
    %1589 = vmatpush2.msra.mxu0 %v1365
    %1590 = vmatprep.subr.mxu0 0.0
    %1591 = vmatpush2.msra.mxu0 %v1364
    %1592 = vmatprep.subr.mxu0 0.0
    %1593 = vmatpush2.msra.mxu0 %v1363
    %1594 = vmatprep.subr.mxu0 0.0
    %1595 = vmatpush2.msra.mxu0 %v1362
    %1596 = vmatprep.subr.mxu0 0.0
    %1597 = vmatpush2.msra.mxu0 %v1361
    %1598 = vmatprep.subr.mxu0 0.0
    %1599 = vmatpush2.msra.mxu0 %v1360
    %1600 = vmatprep.subr.mxu0 0.0
    %1601 = vmatpush2.msra.mxu0 %v1359
    %1602 = vmatprep.mubr.f32.mxu0 %v1277
    %1603 = vmatmul.mubr.f32.gmra.mxu0 %v1276
    %v1604 = vpop.f32.mrf.mxu0
    %v1605 = vadd.f32 %v1535, %v1604
    %v1606 = vpop.f32.mrf.mxu0
    %1607 = vdwg.mxu0
    %1608 = vmatprep.subr.mxu0 0.0
    %1609 = vmatpush1.msra.mxu0 %v1390
    %1610 = vmatprep.subr.mxu0 0.0
    %1611 = vmatpush1.msra.mxu0 %v1389
    %1612 = vmatprep.subr.mxu0 0.0
    %1613 = vmatpush1.msra.mxu0 %v1388
    %1614 = vmatprep.subr.mxu0 0.0
    %1615 = vmatpush1.msra.mxu0 %v1387
    %1616 = vmatprep.subr.mxu0 0.0
    %1617 = vmatpush1.msra.mxu0 %v1386
    %1618 = vmatprep.subr.mxu0 0.0
    %1619 = vmatpush1.msra.mxu0 %v1385
    %1620 = vmatprep.subr.mxu0 0.0
    %1621 = vmatpush1.msra.mxu0 %v1384
    %1622 = vmatprep.subr.mxu0 0.0
    %1623 = vmatpush1.msra.mxu0 %v1383
    %1624 = vmatprep.subr.mxu0 0.0
    %1625 = vmatpush1.msra.mxu0 %v1382
    %1626 = vmatprep.subr.mxu0 0.0
    %1627 = vmatpush1.msra.mxu0 %v1381
    %1628 = vmatprep.subr.mxu0 0.0
    %1629 = vmatpush1.msra.mxu0 %v1380
    %1630 = vmatprep.subr.mxu0 0.0
    %1631 = vmatpush1.msra.mxu0 %v1379
    %1632 = vmatprep.subr.mxu0 0.0
    %1633 = vmatpush1.msra.mxu0 %v1378
    %1634 = vmatprep.subr.mxu0 0.0
    %1635 = vmatpush1.msra.mxu0 %v1377
    %1636 = vmatprep.subr.mxu0 0.0
    %1637 = vmatpush1.msra.mxu0 %v1376
    %1638 = vmatprep.subr.mxu0 0.0
    %1639 = vmatpush1.msra.mxu0 %v1375
    %1640 = vmatprep.subr.mxu0 0.0
    %1641 = vmatpush2.msra.mxu0 0.0
    %1642 = vmatprep.subr.mxu0 0.0
    %1643 = vmatpush2.msra.mxu0 0.0
    %1644 = vmatprep.subr.mxu0 0.0
    %1645 = vmatpush2.msra.mxu0 0.0
    %1646 = vmatprep.subr.mxu0 0.0
    %1647 = vmatpush2.msra.mxu0 0.0
    %1648 = vmatprep.subr.mxu0 0.0
    %1649 = vmatpush2.msra.mxu0 0.0
    %1650 = vmatprep.subr.mxu0 0.0
    %1651 = vmatpush2.msra.mxu0 0.0
    %1652 = vmatprep.subr.mxu0 0.0
    %1653 = vmatpush2.msra.mxu0 0.0
    %1654 = vmatprep.subr.mxu0 0.0
    %1655 = vmatpush2.msra.mxu0 0.0
    %1656 = vmatprep.subr.mxu0 0.0
    %1657 = vmatpush2.msra.mxu0 0.0
    %1658 = vmatprep.subr.mxu0 0.0
    %1659 = vmatpush2.msra.mxu0 0.0
    %1660 = vmatprep.subr.mxu0 0.0
    %1661 = vmatpush2.msra.mxu0 0.0
    %1662 = vmatprep.subr.mxu0 0.0
    %1663 = vmatpush2.msra.mxu0 0.0
    %1664 = vmatprep.subr.mxu0 0.0
    %1665 = vmatpush2.msra.mxu0 0.0
    %1666 = vmatprep.subr.mxu0 0.0
    %1667 = vmatpush2.msra.mxu0 0.0
    %1668 = vmatprep.subr.mxu0 0.0
    %1669 = vmatpush2.msra.mxu0 0.0
    %1670 = vmatprep.subr.mxu0 0.0
    %1671 = vmatpush2.msra.mxu0 0.0
    %1672 = vmatprep.mubr.f32.mxu0 0.0
    %1673 = vmatmul.mubr.f32.gmra.mxu0 %v1278
    %v1674 = vpop.f32.mrf.mxu0
    %v1675 = vadd.f32 %v1605, %v1674
    %v1676 = vpop.f32.mrf.mxu0
    %1677 = vdwg.mxu0
    %v1678 = vmax.f32 %v1675, 0.0
    %v1679 = vld [vmem:[%s6] sm:$0xff]
    %v1680 = vld [vmem:[%s6 + $0x8] sm:$0xff]
    %v1681 = vld [vmem:[%s6 + $0x10] sm:$0xff]
    %v1682 = vld [vmem:[%s6 + $0x18] sm:$0xff]
    %v1683 = vld [vmem:[%s6 + $0x20] sm:$0xff]
    %v1684 = vld [vmem:[%s6 + $0x28] sm:$0xff]
    %v1685 = vld [vmem:[%s6 + $0x30] sm:$0xff]
    %v1686 = vld [vmem:[%s6 + $0x38] sm:$0xff]
    %v1687 = vld [vmem:[%s6 + $0x40] sm:$0xff]
    %v1688 = vld [vmem:[%s6 + $0x48] sm:$0xff]
    %v1689 = vld [vmem:[%s6 + $0x50] sm:$0xff]
    %v1690 = vld [vmem:[%s6 + $0x58] sm:$0xff]
    %v1691 = vld [vmem:[%s6 + $0x60] sm:$0xff]
    %v1692 = vld [vmem:[%s6 + $0x68] sm:$0xff]
    %v1693 = vld [vmem:[%s6 + $0x70] sm:$0xff]
    %v1694 = vld [vmem:[%s6 + $0x78] sm:$0xff]
    %v1695 = vld [vmem:[#allocation9] sm:$0x1]
    %v1697 = vlaneseq
    %v1698 = vshrl.u32 %v1697, 7
    %v1699 = vsub.s32 0, %v1698
    %v1700 = vrot.slane %v1695, %v1699
    %1702 = vmatprep.subr.mxu0 0.0
    %1703 = vmatpush1.msra.mxu0 %v1694
    %1704 = vmatprep.subr.mxu0 0.0
    %1705 = vmatpush1.msra.mxu0 %v1693
    %1706 = vmatprep.subr.mxu0 0.0
    %1707 = vmatpush1.msra.mxu0 %v1692
    %1708 = vmatprep.subr.mxu0 0.0
    %1709 = vmatpush1.msra.mxu0 %v1691
    %1710 = vmatprep.subr.mxu0 0.0
    %1711 = vmatpush1.msra.mxu0 %v1690
    %1712 = vmatprep.subr.mxu0 0.0
    %1713 = vmatpush1.msra.mxu0 %v1689
    %1714 = vmatprep.subr.mxu0 0.0
    %1715 = vmatpush1.msra.mxu0 %v1688
    %1716 = vmatprep.subr.mxu0 0.0
    %1717 = vmatpush1.msra.mxu0 %v1687
    %1718 = vmatprep.subr.mxu0 0.0
    %1719 = vmatpush1.msra.mxu0 %v1686
    %1720 = vmatprep.subr.mxu0 0.0
    %1721 = vmatpush1.msra.mxu0 %v1685
    %1722 = vmatprep.subr.mxu0 0.0
    %1723 = vmatpush1.msra.mxu0 %v1684
    %1724 = vmatprep.subr.mxu0 0.0
    %1725 = vmatpush1.msra.mxu0 %v1683
    %1726 = vmatprep.subr.mxu0 0.0
    %1727 = vmatpush1.msra.mxu0 %v1682
    %1728 = vmatprep.subr.mxu0 0.0
    %1729 = vmatpush1.msra.mxu0 %v1681
    %1730 = vmatprep.subr.mxu0 0.0
    %1731 = vmatpush1.msra.mxu0 %v1680
    %1732 = vmatprep.subr.mxu0 0.0
    %1733 = vmatpush1.msra.mxu0 %v1679
    %1734 = vmatprep.subr.mxu0 0.0
    %1735 = vmatpush2.msra.mxu0 0.0
    %1736 = vmatprep.subr.mxu0 0.0
    %1737 = vmatpush2.msra.mxu0 0.0
    %1738 = vmatprep.subr.mxu0 0.0
    %1739 = vmatpush2.msra.mxu0 0.0
    %1740 = vmatprep.subr.mxu0 0.0
    %1741 = vmatpush2.msra.mxu0 0.0
    %1742 = vmatprep.subr.mxu0 0.0
    %1743 = vmatpush2.msra.mxu0 0.0
    %1744 = vmatprep.subr.mxu0 0.0
    %1745 = vmatpush2.msra.mxu0 0.0
    %1746 = vmatprep.subr.mxu0 0.0
    %1747 = vmatpush2.msra.mxu0 0.0
    %1748 = vmatprep.subr.mxu0 0.0
    %1749 = vmatpush2.msra.mxu0 0.0
    %1750 = vmatprep.subr.mxu0 0.0
    %1751 = vmatpush2.msra.mxu0 0.0
    %1752 = vmatprep.subr.mxu0 0.0
    %1753 = vmatpush2.msra.mxu0 0.0
    %1754 = vmatprep.subr.mxu0 0.0
    %1755 = vmatpush2.msra.mxu0 0.0
    %1756 = vmatprep.subr.mxu0 0.0
    %1757 = vmatpush2.msra.mxu0 0.0
    %1758 = vmatprep.subr.mxu0 0.0
    %1759 = vmatpush2.msra.mxu0 0.0
    %1760 = vmatprep.subr.mxu0 0.0
    %1761 = vmatpush2.msra.mxu0 0.0
    %1762 = vmatprep.subr.mxu0 0.0
    %1763 = vmatpush2.msra.mxu0 0.0
    %1764 = vmatprep.subr.mxu0 0.0
    %1765 = vmatpush2.msra.mxu0 0.0
    %1766 = vmatprep.mubr.f32.mxu0 0.0
    %1767 = vmatmul.mubr.f32.gmra.mxu0 %v1678
    %v1768 = vpop.f32.mrf.mxu0
    %v1769 = vadd.f32 %v1700, %v1768
    %v1770 = vpop.f32.mrf.mxu0
    %1771 = vdwg.mxu0
    %v1772 = vld [vmem:[%s1] sm:$0xff]
    %v1773 = vmul.f32 %v1769, 0.5
    %v1774 = vmul.f32 %v1773, 1.442695
    %v1775 = vpow.pop %v1774
    %1777 = vrot.lane.b32.xlu0 %v1775, 120
    %v1778 = vpop.permute.xlu0 %1777
    %v1780 = vmul.f32 %v1772, %v1778
    %v1781 = vadd.f32 %v1780, %v1769
    %v1782 = vld [vmem:[#allocation10] sm:$0xff]
    %v1783 = vld [vmem:[#allocation12] sm:$0x1]
    %v1785 = vlaneseq
    %v1786 = vshrl.u32 %v1785, 7
    %v1787 = vsub.s32 0, %v1786
    %v1788 = vrot.slane %v1783, %v1787
    %vm1790 = vcmask 64512
    %v1792 = vsel %vm1790, %v1781, 0
    %1794 = vmatprep.subr.mxu0 0.0
    %1795 = vmatpush1.msra.mxu0 0.0
    %1796 = vmatprep.subr.mxu0 0.0
    %1797 = vmatpush1.msra.mxu0 0.0
    %1798 = vmatprep.subr.mxu0 0.0
    %1799 = vmatpush1.msra.mxu0 0.0
    %1800 = vmatprep.subr.mxu0 0.0
    %1801 = vmatpush1.msra.mxu0 0.0
    %1802 = vmatprep.subr.mxu0 0.0
    %1803 = vmatpush1.msra.mxu0 0.0
    %1804 = vmatprep.subr.mxu0 0.0
    %1805 = vmatpush1.msra.mxu0 0.0
    %1806 = vmatprep.subr.mxu0 0.0
    %1807 = vmatpush1.msra.mxu0 0.0
    %1808 = vmatprep.subr.mxu0 0.0
    %1809 = vmatpush1.msra.mxu0 0.0
    %1810 = vmatprep.subr.mxu0 0.0
    %1811 = vmatpush1.msra.mxu0 0.0
    %1812 = vmatprep.subr.mxu0 0.0
    %1813 = vmatpush1.msra.mxu0 0.0
    %1814 = vmatprep.subr.mxu0 0.0
    %1815 = vmatpush1.msra.mxu0 0.0
    %1816 = vmatprep.subr.mxu0 0.0
    %1817 = vmatpush1.msra.mxu0 0.0
    %1818 = vmatprep.subr.mxu0 0.0
    %1819 = vmatpush1.msra.mxu0 0.0
    %1820 = vmatprep.subr.mxu0 0.0
    %1821 = vmatpush1.msra.mxu0 0.0
    %1822 = vmatprep.subr.mxu0 0.0
    %1823 = vmatpush1.msra.mxu0 0.0
    %1824 = vmatprep.subr.mxu0 0.0
    %1825 = vmatpush1.msra.mxu0 %v1782
    %1826 = vmatprep.subr.mxu0 0.0
    %1827 = vmatpush2.msra.mxu0 0.0
    %1828 = vmatprep.subr.mxu0 0.0
    %1829 = vmatpush2.msra.mxu0 0.0
    %1830 = vmatprep.subr.mxu0 0.0
    %1831 = vmatpush2.msra.mxu0 0.0
    %1832 = vmatprep.subr.mxu0 0.0
    %1833 = vmatpush2.msra.mxu0 0.0
    %1834 = vmatprep.subr.mxu0 0.0
    %1835 = vmatpush2.msra.mxu0 0.0
    %1836 = vmatprep.subr.mxu0 0.0
    %1837 = vmatpush2.msra.mxu0 0.0
    %1838 = vmatprep.subr.mxu0 0.0
    %1839 = vmatpush2.msra.mxu0 0.0
    %1840 = vmatprep.subr.mxu0 0.0
    %1841 = vmatpush2.msra.mxu0 0.0
    %1842 = vmatprep.subr.mxu0 0.0
    %1843 = vmatpush2.msra.mxu0 0.0
    %1844 = vmatprep.subr.mxu0 0.0
    %1845 = vmatpush2.msra.mxu0 0.0
    %1846 = vmatprep.subr.mxu0 0.0
    %1847 = vmatpush2.msra.mxu0 0.0
    %1848 = vmatprep.subr.mxu0 0.0
    %1849 = vmatpush2.msra.mxu0 0.0
    %1850 = vmatprep.subr.mxu0 0.0
    %1851 = vmatpush2.msra.mxu0 0.0
    %1852 = vmatprep.subr.mxu0 0.0
    %1853 = vmatpush2.msra.mxu0 0.0
    %1854 = vmatprep.subr.mxu0 0.0
    %1855 = vmatpush2.msra.mxu0 0.0
    %1856 = vmatprep.subr.mxu0 0.0
    %1857 = vmatpush2.msra.mxu0 0.0
    %1858 = vmatprep.mubr.f32.mxu0 0.0
    %1859 = vmatmul.mubr.f32.gmra.mxu0 %v1792
    %v1860 = vpop.f32.mrf.mxu0
    %v1861 = vadd.f32 %v1788, %v1860
    %v1862 = vpop.f32.mrf.mxu0
    %1863 = vdwg.mxu0
    %v1864 = vmax.f32 %v1861, 0.0
    %v1865 = vld [vmem:[#allocation13] sm:$0xff]
    %v1866 = vld [vmem:[#allocation13 + $0x8] sm:$0xff]
    %v1867 = vld [vmem:[#allocation13 + $0x10] sm:$0xff]
    %v1868 = vld [vmem:[#allocation13 + $0x18] sm:$0xff]
    %v1869 = vld [vmem:[#allocation13 + $0x20] sm:$0xff]
    %v1870 = vld [vmem:[#allocation13 + $0x28] sm:$0xff]
    %v1871 = vld [vmem:[#allocation13 + $0x30] sm:$0xff]
    %v1872 = vld [vmem:[#allocation13 + $0x38] sm:$0xff]
    %v1873 = vld [vmem:[#allocation13 + $0x40] sm:$0xff]
    %v1874 = vld [vmem:[#allocation13 + $0x48] sm:$0xff]
    %v1875 = vld [vmem:[#allocation13 + $0x50] sm:$0xff]
    %v1876 = vld [vmem:[#allocation13 + $0x58] sm:$0xff]
    %v1877 = vld [vmem:[#allocation13 + $0x60] sm:$0xff]
    %v1878 = vld [vmem:[#allocation13 + $0x68] sm:$0xff]
    %v1879 = vld [vmem:[#allocation13 + $0x70] sm:$0xff]
    %v1880 = vld [vmem:[#allocation13 + $0x78] sm:$0xff]
    %v1881 = vld [vmem:[#allocation15] sm:$0x1]
    %v1883 = vlaneseq
    %v1884 = vshrl.u32 %v1883, 7
    %v1885 = vsub.s32 0, %v1884
    %v1886 = vrot.slane %v1881, %v1885
    %1888 = vmatprep.subr.mxu0 0.0
    %1889 = vmatpush1.msra.mxu0 %v1880
    %1890 = vmatprep.subr.mxu0 0.0
    %1891 = vmatpush1.msra.mxu0 %v1879
    %1892 = vmatprep.subr.mxu0 0.0
    %1893 = vmatpush1.msra.mxu0 %v1878
    %1894 = vmatprep.subr.mxu0 0.0
    %1895 = vmatpush1.msra.mxu0 %v1877
    %1896 = vmatprep.subr.mxu0 0.0
    %1897 = vmatpush1.msra.mxu0 %v1876
    %1898 = vmatprep.subr.mxu0 0.0
    %1899 = vmatpush1.msra.mxu0 %v1875
    %1900 = vmatprep.subr.mxu0 0.0
    %1901 = vmatpush1.msra.mxu0 %v1874
    %1902 = vmatprep.subr.mxu0 0.0
    %1903 = vmatpush1.msra.mxu0 %v1873
    %1904 = vmatprep.subr.mxu0 0.0
    %1905 = vmatpush1.msra.mxu0 %v1872
    %1906 = vmatprep.subr.mxu0 0.0
    %1907 = vmatpush1.msra.mxu0 %v1871
    %1908 = vmatprep.subr.mxu0 0.0
    %1909 = vmatpush1.msra.mxu0 %v1870
    %1910 = vmatprep.subr.mxu0 0.0
    %1911 = vmatpush1.msra.mxu0 %v1869
    %1912 = vmatprep.subr.mxu0 0.0
    %1913 = vmatpush1.msra.mxu0 %v1868
    %1914 = vmatprep.subr.mxu0 0.0
    %1915 = vmatpush1.msra.mxu0 %v1867
    %1916 = vmatprep.subr.mxu0 0.0
    %1917 = vmatpush1.msra.mxu0 %v1866
    %1918 = vmatprep.subr.mxu0 0.0
    %1919 = vmatpush1.msra.mxu0 %v1865
    %1920 = vmatprep.subr.mxu0 0.0
    %1921 = vmatpush2.msra.mxu0 0.0
    %1922 = vmatprep.subr.mxu0 0.0
    %1923 = vmatpush2.msra.mxu0 0.0
    %1924 = vmatprep.subr.mxu0 0.0
    %1925 = vmatpush2.msra.mxu0 0.0
    %1926 = vmatprep.subr.mxu0 0.0
    %1927 = vmatpush2.msra.mxu0 0.0
    %1928 = vmatprep.subr.mxu0 0.0
    %1929 = vmatpush2.msra.mxu0 0.0
    %1930 = vmatprep.subr.mxu0 0.0
    %1931 = vmatpush2.msra.mxu0 0.0
    %1932 = vmatprep.subr.mxu0 0.0
    %1933 = vmatpush2.msra.mxu0 0.0
    %1934 = vmatprep.subr.mxu0 0.0
    %1935 = vmatpush2.msra.mxu0 0.0
    %1936 = vmatprep.subr.mxu0 0.0
    %1937 = vmatpush2.msra.mxu0 0.0
    %1938 = vmatprep.subr.mxu0 0.0
    %1939 = vmatpush2.msra.mxu0 0.0
    %1940 = vmatprep.subr.mxu0 0.0
    %1941 = vmatpush2.msra.mxu0 0.0
    %1942 = vmatprep.subr.mxu0 0.0
    %1943 = vmatpush2.msra.mxu0 0.0
    %1944 = vmatprep.subr.mxu0 0.0
    %1945 = vmatpush2.msra.mxu0 0.0
    %1946 = vmatprep.subr.mxu0 0.0
    %1947 = vmatpush2.msra.mxu0 0.0
    %1948 = vmatprep.subr.mxu0 0.0
    %1949 = vmatpush2.msra.mxu0 0.0
    %1950 = vmatprep.subr.mxu0 0.0
    %1951 = vmatpush2.msra.mxu0 0.0
    %1952 = vmatprep.mubr.f32.mxu0 0.0
    %1953 = vmatmul.mubr.f32.gmra.mxu0 %v1864
    %v1954 = vpop.f32.mrf.mxu0
    %v1955 = vadd.f32 %v1886, %v1954
    %v1956 = vpop.f32.mrf.mxu0
    %1957 = vdwg.mxu0
    %v1958 = vmax.f32 %v1955, 0.0
    %v1959 = vld [vmem:[#allocation16] sm:$0xff]
    %v1960 = vld [vmem:[#allocation16 + $0x8] sm:$0xff]
    %v1961 = vld [vmem:[#allocation16 + $0x10] sm:$0xff]
    %v1962 = vld [vmem:[#allocation16 + $0x18] sm:$0xff]
    %v1963 = vld [vmem:[#allocation16 + $0x20] sm:$0xff]
    %v1964 = vld [vmem:[#allocation16 + $0x28] sm:$0xff]
    %v1965 = vld [vmem:[#allocation16 + $0x30] sm:$0xff]
    %v1966 = vld [vmem:[#allocation16 + $0x38] sm:$0xff]
    %v1967 = vld [vmem:[#allocation16 + $0x40] sm:$0xff]
    %v1968 = vld [vmem:[#allocation16 + $0x48] sm:$0xff]
    %v1969 = vld [vmem:[#allocation16 + $0x50] sm:$0xff]
    %v1970 = vld [vmem:[#allocation16 + $0x58] sm:$0xff]
    %v1971 = vld [vmem:[#allocation16 + $0x60] sm:$0xff]
    %v1972 = vld [vmem:[#allocation16 + $0x68] sm:$0xff]
    %v1973 = vld [vmem:[#allocation16 + $0x70] sm:$0xff]
    %v1974 = vld [vmem:[#allocation16 + $0x78] sm:$0xff]
    %v1975 = vld [vmem:[#allocation18] sm:$0x1]
    %v1977 = vlaneseq
    %v1978 = vshrl.u32 %v1977, 7
    %v1979 = vsub.s32 0, %v1978
    %v1980 = vrot.slane %v1975, %v1979
    %1982 = vmatprep.subr.mxu0 0.0
    %1983 = vmatpush1.msra.mxu0 %v1974
    %1984 = vmatprep.subr.mxu0 0.0
    %1985 = vmatpush1.msra.mxu0 %v1973
    %1986 = vmatprep.subr.mxu0 0.0
    %1987 = vmatpush1.msra.mxu0 %v1972
    %1988 = vmatprep.subr.mxu0 0.0
    %1989 = vmatpush1.msra.mxu0 %v1971
    %1990 = vmatprep.subr.mxu0 0.0
    %1991 = vmatpush1.msra.mxu0 %v1970
    %1992 = vmatprep.subr.mxu0 0.0
    %1993 = vmatpush1.msra.mxu0 %v1969
    %1994 = vmatprep.subr.mxu0 0.0
    %1995 = vmatpush1.msra.mxu0 %v1968
    %1996 = vmatprep.subr.mxu0 0.0
    %1997 = vmatpush1.msra.mxu0 %v1967
    %1998 = vmatprep.subr.mxu0 0.0
    %1999 = vmatpush1.msra.mxu0 %v1966
    %2000 = vmatprep.subr.mxu0 0.0
    %2001 = vmatpush1.msra.mxu0 %v1965
    %2002 = vmatprep.subr.mxu0 0.0
    %2003 = vmatpush1.msra.mxu0 %v1964
    %2004 = vmatprep.subr.mxu0 0.0
    %2005 = vmatpush1.msra.mxu0 %v1963
    %2006 = vmatprep.subr.mxu0 0.0
    %2007 = vmatpush1.msra.mxu0 %v1962
    %2008 = vmatprep.subr.mxu0 0.0
    %2009 = vmatpush1.msra.mxu0 %v1961
    %2010 = vmatprep.subr.mxu0 0.0
    %2011 = vmatpush1.msra.mxu0 %v1960
    %2012 = vmatprep.subr.mxu0 0.0
    %2013 = vmatpush1.msra.mxu0 %v1959
    %2014 = vmatprep.subr.mxu0 0.0
    %2015 = vmatpush2.msra.mxu0 0.0
    %2016 = vmatprep.subr.mxu0 0.0
    %2017 = vmatpush2.msra.mxu0 0.0
    %2018 = vmatprep.subr.mxu0 0.0
    %2019 = vmatpush2.msra.mxu0 0.0
    %2020 = vmatprep.subr.mxu0 0.0
    %2021 = vmatpush2.msra.mxu0 0.0
    %2022 = vmatprep.subr.mxu0 0.0
    %2023 = vmatpush2.msra.mxu0 0.0
    %2024 = vmatprep.subr.mxu0 0.0
    %2025 = vmatpush2.msra.mxu0 0.0
    %2026 = vmatprep.subr.mxu0 0.0
    %2027 = vmatpush2.msra.mxu0 0.0
    %2028 = vmatprep.subr.mxu0 0.0
    %2029 = vmatpush2.msra.mxu0 0.0
    %2030 = vmatprep.subr.mxu0 0.0
    %2031 = vmatpush2.msra.mxu0 0.0
    %2032 = vmatprep.subr.mxu0 0.0
    %2033 = vmatpush2.msra.mxu0 0.0
    %2034 = vmatprep.subr.mxu0 0.0
    %2035 = vmatpush2.msra.mxu0 0.0
    %2036 = vmatprep.subr.mxu0 0.0
    %2037 = vmatpush2.msra.mxu0 0.0
    %2038 = vmatprep.subr.mxu0 0.0
    %2039 = vmatpush2.msra.mxu0 0.0
    %2040 = vmatprep.subr.mxu0 0.0
    %2041 = vmatpush2.msra.mxu0 0.0
    %2042 = vmatprep.subr.mxu0 0.0
    %2043 = vmatpush2.msra.mxu0 0.0
    %2044 = vmatprep.subr.mxu0 0.0
    %2045 = vmatpush2.msra.mxu0 0.0
    %2046 = vmatprep.mubr.f32.mxu0 0.0
    %2047 = vmatmul.mubr.f32.gmra.mxu0 %v1958
    %v2048 = vpop.f32.mrf.mxu0
    %v2049 = vadd.f32 %v1980, %v2048
    %v2050 = vpop.f32.mrf.mxu0
    %2051 = vdwg.mxu0
    %v2052 = vmax.f32 %v2049, 0.0
    %v2053 = vld [vmem:[#allocation19] sm:$0xff]
    %v2054 = vld [vmem:[#allocation19 + $0x8] sm:$0xff]
    %v2055 = vld [vmem:[#allocation19 + $0x10] sm:$0xff]
    %v2056 = vld [vmem:[#allocation19 + $0x18] sm:$0xff]
    %v2057 = vld [vmem:[#allocation19 + $0x20] sm:$0xff]
    %v2058 = vld [vmem:[#allocation19 + $0x28] sm:$0xff]
    %v2059 = vld [vmem:[#allocation19 + $0x30] sm:$0xff]
    %v2060 = vld [vmem:[#allocation19 + $0x38] sm:$0xff]
    %v2061 = vld [vmem:[#allocation19 + $0x40] sm:$0xff]
    %v2062 = vld [vmem:[#allocation19 + $0x48] sm:$0xff]
    %v2063 = vld [vmem:[#allocation19 + $0x50] sm:$0xff]
    %v2064 = vld [vmem:[#allocation19 + $0x58] sm:$0xff]
    %v2065 = vld [vmem:[#allocation19 + $0x60] sm:$0xff]
    %v2066 = vld [vmem:[#allocation19 + $0x68] sm:$0xff]
    %v2067 = vld [vmem:[#allocation19 + $0x70] sm:$0xff]
    %v2068 = vld [vmem:[#allocation19 + $0x78] sm:$0xff]
    %v2069 = vld [vmem:[#allocation19 + $0x80] sm:$0xff]
    %v2070 = vld [vmem:[#allocation19 + $0x88] sm:$0xff]
    %v2071 = vld [vmem:[#allocation19 + $0x90] sm:$0xff]
    %v2072 = vld [vmem:[#allocation19 + $0x98] sm:$0xff]
    %v2073 = vld [vmem:[#allocation19 + $0xa0] sm:$0xff]
    %v2074 = vld [vmem:[#allocation19 + $0xa8] sm:$0xff]
    %v2075 = vld [vmem:[#allocation19 + $0xb0] sm:$0xff]
    %v2076 = vld [vmem:[#allocation19 + $0xb8] sm:$0xff]
    %v2077 = vld [vmem:[#allocation19 + $0xc0] sm:$0xff]
    %v2078 = vld [vmem:[#allocation19 + $0xc8] sm:$0xff]
    %v2079 = vld [vmem:[#allocation19 + $0xd0] sm:$0xff]
    %v2080 = vld [vmem:[#allocation19 + $0xd8] sm:$0xff]
    %v2081 = vld [vmem:[#allocation19 + $0xe0] sm:$0xff]
    %v2082 = vld [vmem:[#allocation19 + $0xe8] sm:$0xff]
    %v2083 = vld [vmem:[#allocation19 + $0xf0] sm:$0xff]
    %v2084 = vld [vmem:[#allocation19 + $0xf8] sm:$0xff]
    %v2085 = vld [vmem:[#allocation19 + $0x100] sm:$0xff]
    %v2086 = vld [vmem:[#allocation19 + $0x108] sm:$0xff]
    %v2087 = vld [vmem:[#allocation19 + $0x110] sm:$0xff]
    %v2088 = vld [vmem:[#allocation19 + $0x118] sm:$0xff]
    %v2089 = vld [vmem:[#allocation19 + $0x120] sm:$0xff]
    %v2090 = vld [vmem:[#allocation19 + $0x128] sm:$0xff]
    %v2091 = vld [vmem:[#allocation19 + $0x130] sm:$0xff]
    %v2092 = vld [vmem:[#allocation19 + $0x138] sm:$0xff]
    %v2093 = vld [vmem:[#allocation19 + $0x140] sm:$0xff]
    %v2094 = vld [vmem:[#allocation19 + $0x148] sm:$0xff]
    %v2095 = vld [vmem:[#allocation19 + $0x150] sm:$0xff]
    %v2096 = vld [vmem:[#allocation19 + $0x158] sm:$0xff]
    %v2097 = vld [vmem:[#allocation19 + $0x160] sm:$0xff]
    %v2098 = vld [vmem:[#allocation19 + $0x168] sm:$0xff]
    %v2099 = vld [vmem:[#allocation19 + $0x170] sm:$0xff]
    %v2100 = vld [vmem:[#allocation19 + $0x178] sm:$0xff]
    %v2101 = vld [vmem:[#allocation19 + $0x180] sm:$0xff]
    %v2102 = vld [vmem:[#allocation19 + $0x188] sm:$0xff]
    %v2103 = vld [vmem:[#allocation19 + $0x190] sm:$0xff]
    %v2104 = vld [vmem:[#allocation19 + $0x198] sm:$0xff]
    %v2105 = vld [vmem:[#allocation19 + $0x1a0] sm:$0xff]
    %v2106 = vld [vmem:[#allocation19 + $0x1a8] sm:$0xff]
    %v2107 = vld [vmem:[#allocation19 + $0x1b0] sm:$0xff]
    %v2108 = vld [vmem:[#allocation19 + $0x1b8] sm:$0xff]
    %v2109 = vld [vmem:[#allocation19 + $0x1c0] sm:$0xff]
    %v2110 = vld [vmem:[#allocation19 + $0x1c8] sm:$0xff]
    %v2111 = vld [vmem:[#allocation19 + $0x1d0] sm:$0xff]
    %v2112 = vld [vmem:[#allocation19 + $0x1d8] sm:$0xff]
    %v2113 = vld [vmem:[#allocation19 + $0x1e0] sm:$0xff]
    %v2114 = vld [vmem:[#allocation19 + $0x1e8] sm:$0xff]
    %v2115 = vld [vmem:[#allocation19 + $0x1f0] sm:$0xff]
    %v2116 = vld [vmem:[#allocation19 + $0x1f8] sm:$0xff]
    %v2117 = vld [vmem:[#allocation21] sm:$0xf]
    %v2119 = vlaneseq
    %v2120 = vshrl.u32 %v2119, 7
    %v2121 = vsub.s32 0, %v2120
    %v2122 = vrot.slane %v2117, %v2121
    %v2123 = vlaneseq
    %v2124 = vshrl.u32 %v2123, 7
    %v2125 = vsub.s32 1, %v2124
    %v2126 = vrot.slane %v2117, %v2125
    %v2127 = vlaneseq
    %v2128 = vshrl.u32 %v2127, 7
    %v2129 = vsub.s32 2, %v2128
    %v2130 = vrot.slane %v2117, %v2129
    %v2131 = vlaneseq
    %v2132 = vshrl.u32 %v2131, 7
    %v2133 = vsub.s32 3, %v2132
    %v2134 = vrot.slane %v2117, %v2133
    %2139 = vmatprep.subr.mxu0 %v2114
    %2140 = vmatpush1.msra.mxu0 %v2113
    %2141 = vmatprep.subr.mxu0 %v2110
    %2142 = vmatpush1.msra.mxu0 %v2109
    %2143 = vmatprep.subr.mxu0 %v2106
    %2144 = vmatpush1.msra.mxu0 %v2105
    %2145 = vmatprep.subr.mxu0 %v2102
    %2146 = vmatpush1.msra.mxu0 %v2101
    %2147 = vmatprep.subr.mxu0 %v2098
    %2148 = vmatpush1.msra.mxu0 %v2097
    %2149 = vmatprep.subr.mxu0 %v2094
    %2150 = vmatpush1.msra.mxu0 %v2093
    %2151 = vmatprep.subr.mxu0 %v2090
    %2152 = vmatpush1.msra.mxu0 %v2089
    %2153 = vmatprep.subr.mxu0 %v2086
    %2154 = vmatpush1.msra.mxu0 %v2085
    %2155 = vmatprep.subr.mxu0 %v2082
    %2156 = vmatpush1.msra.mxu0 %v2081
    %2157 = vmatprep.subr.mxu0 %v2078
    %2158 = vmatpush1.msra.mxu0 %v2077
    %2159 = vmatprep.subr.mxu0 %v2074
    %2160 = vmatpush1.msra.mxu0 %v2073
    %2161 = vmatprep.subr.mxu0 %v2070
    %2162 = vmatpush1.msra.mxu0 %v2069
    %2163 = vmatprep.subr.mxu0 %v2066
    %2164 = vmatpush1.msra.mxu0 %v2065
    %2165 = vmatprep.subr.mxu0 %v2062
    %2166 = vmatpush1.msra.mxu0 %v2061
    %2167 = vmatprep.subr.mxu0 %v2058
    %2168 = vmatpush1.msra.mxu0 %v2057
    %2169 = vmatprep.subr.mxu0 %v2054
    %2170 = vmatpush1.msra.mxu0 %v2053
    %2171 = vmatprep.subr.mxu0 0.0
    %2172 = vmatpush2.msra.mxu0 0.0
    %2173 = vmatprep.subr.mxu0 0.0
    %2174 = vmatpush2.msra.mxu0 0.0
    %2175 = vmatprep.subr.mxu0 0.0
    %2176 = vmatpush2.msra.mxu0 0.0
    %2177 = vmatprep.subr.mxu0 0.0
    %2178 = vmatpush2.msra.mxu0 0.0
    %2179 = vmatprep.subr.mxu0 0.0
    %2180 = vmatpush2.msra.mxu0 0.0
    %2181 = vmatprep.subr.mxu0 0.0
    %2182 = vmatpush2.msra.mxu0 0.0
    %2183 = vmatprep.subr.mxu0 0.0
    %2184 = vmatpush2.msra.mxu0 0.0
    %2185 = vmatprep.subr.mxu0 0.0
    %2186 = vmatpush2.msra.mxu0 0.0
    %2187 = vmatprep.subr.mxu0 0.0
    %2188 = vmatpush2.msra.mxu0 0.0
    %2189 = vmatprep.subr.mxu0 0.0
    %2190 = vmatpush2.msra.mxu0 0.0
    %2191 = vmatprep.subr.mxu0 0.0
    %2192 = vmatpush2.msra.mxu0 0.0
    %2193 = vmatprep.subr.mxu0 0.0
    %2194 = vmatpush2.msra.mxu0 0.0
    %2195 = vmatprep.subr.mxu0 0.0
    %2196 = vmatpush2.msra.mxu0 0.0
    %2197 = vmatprep.subr.mxu0 0.0
    %2198 = vmatpush2.msra.mxu0 0.0
    %2199 = vmatprep.subr.mxu0 0.0
    %2200 = vmatpush2.msra.mxu0 0.0
    %2201 = vmatprep.subr.mxu0 0.0
    %2202 = vmatpush2.msra.mxu0 0.0
    %2203 = vmatprep.mubr.f32.mxu0 0.0
    %2204 = vmatmul.mubr.f32.gmra.mxu0 %v2052
    %v2205 = vpop.f32.mrf.mxu0
    %v2206 = vadd.f32 %v2122, %v2205
    %v2207 = vpop.f32.mrf.mxu0
    %v2208 = vadd.f32 %v2126, %v2207
    %2209 = vdwg.mxu0
    %2210 = vmatprep.subr.mxu0 %v2116
    %2211 = vmatpush1.msra.mxu0 %v2115
    %2212 = vmatprep.subr.mxu0 %v2112
    %2213 = vmatpush1.msra.mxu0 %v2111
    %2214 = vmatprep.subr.mxu0 %v2108
    %2215 = vmatpush1.msra.mxu0 %v2107
    %2216 = vmatprep.subr.mxu0 %v2104
    %2217 = vmatpush1.msra.mxu0 %v2103
    %2218 = vmatprep.subr.mxu0 %v2100
    %2219 = vmatpush1.msra.mxu0 %v2099
    %2220 = vmatprep.subr.mxu0 %v2096
    %2221 = vmatpush1.msra.mxu0 %v2095
    %2222 = vmatprep.subr.mxu0 %v2092
    %2223 = vmatpush1.msra.mxu0 %v2091
    %2224 = vmatprep.subr.mxu0 %v2088
    %2225 = vmatpush1.msra.mxu0 %v2087
    %2226 = vmatprep.subr.mxu0 %v2084
    %2227 = vmatpush1.msra.mxu0 %v2083
    %2228 = vmatprep.subr.mxu0 %v2080
    %2229 = vmatpush1.msra.mxu0 %v2079
    %2230 = vmatprep.subr.mxu0 %v2076
    %2231 = vmatpush1.msra.mxu0 %v2075
    %2232 = vmatprep.subr.mxu0 %v2072
    %2233 = vmatpush1.msra.mxu0 %v2071
    %2234 = vmatprep.subr.mxu0 %v2068
    %2235 = vmatpush1.msra.mxu0 %v2067
    %2236 = vmatprep.subr.mxu0 %v2064
    %2237 = vmatpush1.msra.mxu0 %v2063
    %2238 = vmatprep.subr.mxu0 %v2060
    %2239 = vmatpush1.msra.mxu0 %v2059
    %2240 = vmatprep.subr.mxu0 %v2056
    %2241 = vmatpush1.msra.mxu0 %v2055
    %2242 = vmatprep.subr.mxu0 0.0
    %2243 = vmatpush2.msra.mxu0 0.0
    %2244 = vmatprep.subr.mxu0 0.0
    %2245 = vmatpush2.msra.mxu0 0.0
    %2246 = vmatprep.subr.mxu0 0.0
    %2247 = vmatpush2.msra.mxu0 0.0
    %2248 = vmatprep.subr.mxu0 0.0
    %2249 = vmatpush2.msra.mxu0 0.0
    %2250 = vmatprep.subr.mxu0 0.0
    %2251 = vmatpush2.msra.mxu0 0.0
    %2252 = vmatprep.subr.mxu0 0.0
    %2253 = vmatpush2.msra.mxu0 0.0
    %2254 = vmatprep.subr.mxu0 0.0
    %2255 = vmatpush2.msra.mxu0 0.0
    %2256 = vmatprep.subr.mxu0 0.0
    %2257 = vmatpush2.msra.mxu0 0.0
    %2258 = vmatprep.subr.mxu0 0.0
    %2259 = vmatpush2.msra.mxu0 0.0
    %2260 = vmatprep.subr.mxu0 0.0
    %2261 = vmatpush2.msra.mxu0 0.0
    %2262 = vmatprep.subr.mxu0 0.0
    %2263 = vmatpush2.msra.mxu0 0.0
    %2264 = vmatprep.subr.mxu0 0.0
    %2265 = vmatpush2.msra.mxu0 0.0
    %2266 = vmatprep.subr.mxu0 0.0
    %2267 = vmatpush2.msra.mxu0 0.0
    %2268 = vmatprep.subr.mxu0 0.0
    %2269 = vmatpush2.msra.mxu0 0.0
    %2270 = vmatprep.subr.mxu0 0.0
    %2271 = vmatpush2.msra.mxu0 0.0
    %2272 = vmatprep.subr.mxu0 0.0
    %2273 = vmatpush2.msra.mxu0 0.0
    %2274 = vmatprep.mubr.f32.mxu0 0.0
    %2275 = vmatmul.mubr.f32.gmra.mxu0 %v2052
    %v2276 = vpop.f32.mrf.mxu0
    %v2277 = vadd.f32 %v2130, %v2276
    %v2278 = vpop.f32.mrf.mxu0
    %v2279 = vadd.f32 %v2134, %v2278
    %2280 = vdwg.mxu0
    %2281 = vst [vmem:[%s16] sm:$0xff] %v2206
    %2282 = vst [vmem:[%s16 + $0x8] sm:$0xff] %v2208
    %2283 = vst [vmem:[%s16 + $0x10] sm:$0xff] %v2277
    %2284 = vst [vmem:[%s16 + $0x18] sm:$0xff] %v2279
    %2285 = vst.msk [vmem:[%s17] sm:$0xff] %vm1790, %v1769
    %2287 = vrot.lane.b32.xlu0 %v1769, 120
    %v2288 = vpop.permute.xlu0 %2287
    %2290 = vst.msk [vmem:[%s18] sm:$0xff] %vm1790, %v2288
    %2291 = vst.msk [vmem:[%s19] sm:$0xff] %vm1790, %v1781
    // Predicated region
    $region118: #{sdf_vae_forward.1} parent=1 // pred_check
      _
    $region119: #{sdf_vae_forward.1} parent=1 // pred_check_branch
      %2293 = sbr.rel (0) target = $region121
    $region120: #{sdf_vae_forward.1} parent=1 // pred_region
      _
    $region121: #{sdf_vae_forward.1} parent=1 // pred_fallthru
      _
    // Predicated region
    $region122: #{sdf_vae_forward.1} parent=1 // pred_check
      _
    $region123: #{sdf_vae_forward.1} parent=1 // pred_check_branch
      %2295 = sbr.rel (0) target = $region125
    $region124: #{sdf_vae_forward.1} parent=1 // pred_region
      _
    $region125: #{sdf_vae_forward.1} parent=1 // pred_fallthru
      _
    // Predicated region
    $region126: #{sdf_vae_forward.1} parent=1 // pred_check
      _
    $region127: #{sdf_vae_forward.1} parent=1 // pred_check_branch
      %2297 = sbr.rel (0) target = $region129
    $region128: #{sdf_vae_forward.1} parent=1 // pred_region
      _
    $region129: #{sdf_vae_forward.1} parent=1 // pred_fallthru
      _
    // Predicated region
    $region130: #{sdf_vae_forward.1} parent=1 // pred_check
      _
    $region131: #{sdf_vae_forward.1} parent=1 // pred_check_branch
      %2299 = sbr.rel (0) target = $region133
    $region132: #{sdf_vae_forward.1} parent=1 // pred_region
      _
    $region133: #{sdf_vae_forward.1} parent=1 // pred_fallthru
      _
    // Predicated region
    $region134: #{sdf_vae_forward.1} parent=1 // pred_check
      _
    $region135: #{sdf_vae_forward.1} parent=1 // pred_check_branch
      %2301 = sbr.rel (0) target = $region137
    $region136: #{sdf_vae_forward.1} parent=1 // pred_region
      _
    $region137: #{sdf_vae_forward.1} parent=1 // pred_fallthru
      _
    // Predicated region
    $region138: #{sdf_vae_forward.1} parent=1 // pred_check
      _
    $region139: #{sdf_vae_forward.1} parent=1 // pred_check_branch
      %2303 = sbr.rel (0) target = $region141
    $region140: #{sdf_vae_forward.1} parent=1 // pred_region
      _
    $region141: #{sdf_vae_forward.1} parent=1 // pred_fallthru
      _
    // Predicated region
    $region142: #{sdf_vae_forward.1} parent=1 // pred_check
      _
    $region143: #{sdf_vae_forward.1} parent=1 // pred_check_branch
      %2305 = sbr.rel (0) target = $region145
    $region144: #{sdf_vae_forward.1} parent=1 // pred_region
      _
    $region145: #{sdf_vae_forward.1} parent=1 // pred_fallthru
      _
    // Predicated region
    $region146: #{sdf_vae_forward.1} parent=1 // pred_check
      _
    $region147: #{sdf_vae_forward.1} parent=1 // pred_check_branch
      %2307 = sbr.rel (0) target = $region149
    $region148: #{sdf_vae_forward.1} parent=1 // pred_region
      _
    $region149: #{sdf_vae_forward.1} parent=1 // pred_fallthru
      _
    %2308 = vsyncpa [#allocation3], 1
    %2309 = vsyncpa [#allocation5], 1
    %2310 = vsyncpa [#allocation8], 1
    %2311 = vsyncpa [#allocation11], 1
    %2312 = vsyncpa [#allocation14], 1
    %2313 = vsyncpa [#allocation17], 1
    %2314 = vsyncpa [#allocation20], 1

</llo_original>
